<compile_context>
chip_gen: v5e
topology: v5e:2x2
jax: 0.10.0
libtpu: 0.0.40
codegen_flags: <defaults>
</compile_context>

<pallas_src>
import functools

import jax
import jax.numpy as jnp
from jax.experimental import pallas as pl
from jax.experimental.pallas import tpu as pltpu


# ----------------------------- fused LSTM + FC kernel -----------------------------
def _make_fused_kernel(num_layers, T, Bp, H):
    """Build the fused (num_layers x LSTM + FC) kernel, specialized on static shapes."""

    def kernel(*refs):
        # refs = [x, (wih_t, whh_t, b) * num_layers, fc_w_t, fc_b, out, hseq_scratch]
        x_ref = refs[0]
        w_refs = refs[1:1 + 3 * num_layers]
        fcw_ref = refs[1 + 3 * num_layers]
        fcb_ref = refs[2 + 3 * num_layers]
        out_ref = refs[3 + 3 * num_layers]
        hseq_sc = refs[4 + 3 * num_layers]

        xin = x_ref[...]  # (T*Bp, I0) f32 -- whole sequence resident in VMEM
        h = jnp.zeros((Bp, H), jnp.float32)
        for layer in range(num_layers):
            wih = w_refs[3 * layer][...]       # (I_l, 4H)
            whh = w_refs[3 * layer + 1][...]   # (H, 4H)
            b = w_refs[3 * layer + 2][...]     # (1, 4H)  == b_ih + b_hh

            # Batched input projection for ALL timesteps: off the serial recurrence path.
            xproj = jnp.dot(xin, wih, preferred_element_type=jnp.float32) + b  # (T*Bp, 4H)

            h = jnp.zeros((Bp, H), jnp.float32)
            c = jnp.zeros((Bp, H), jnp.float32)
            for t in range(T):  # fully unrolled: T is small and static
                gates = xproj[t * Bp:(t + 1) * Bp, :] + jnp.dot(
                    h, whh, preferred_element_type=jnp.float32)      # (Bp, 4H)
                sig = jax.nn.sigmoid(gates)   # full 128-lane vreg on the EUP
                th = jnp.tanh(gates)          # full 128-lane vreg on the EUP
                i_g = sig[:, 0 * H:1 * H]
                f_g = sig[:, 1 * H:2 * H]
                g_g = th[:, 2 * H:3 * H]
                o_g = sig[:, 3 * H:4 * H]
                c = f_g * c + i_g * g_g
                h = o_g * jnp.tanh(c)
                if layer < num_layers - 1:
                    # Only non-final layers need the full h sequence (feeds next layer).
                    hseq_sc[t * Bp:(t + 1) * Bp, :] = h
            if layer < num_layers - 1:
                # TODO(synk): training-mode inter-layer dropout omitted (eval == identity).
                xin = hseq_sc[...]             # (T*Bp, H)

        # Last-timestep hidden of the top layer -> Dropout(eval: identity) -> Linear.
        out_ref[...] = (
            jnp.dot(h, fcw_ref[...], preferred_element_type=jnp.float32) + fcb_ref[...]
        ).astype(out_ref.dtype)

    return kernel


# ----------------------------- parameter preparation -----------------------------
def prepare_params(params):
    """One-time conversion of PyTorch-layout params to the kernel layout."""
    H = params["lstm"][0]["w_hh"].shape[1]
    C = params["fc_w"].shape[0]
    C_pad = ((C + 127) // 128) * 128
    lstm = []
    for layer in params["lstm"]:
        lstm.append(dict(
            wih_t=jnp.transpose(layer["w_ih"]).astype(jnp.float32),                # (I_l, 4H)
            whh_t=jnp.transpose(layer["w_hh"]).astype(jnp.float32),                # (H, 4H)
            b=(layer["b_ih"] + layer["b_hh"]).reshape(1, -1).astype(jnp.float32),  # (1, 4H)
        ))
    fc_w_t = jnp.zeros((H, C_pad), jnp.float32).at[:, :C].set(
        jnp.transpose(params["fc_w"]).astype(jnp.float32))                          # (H, C_pad)
    fc_b = jnp.zeros((1, C_pad), jnp.float32).at[0, :C].set(
        params["fc_b"].astype(jnp.float32))                                         # (1, C_pad)
    return dict(lstm=lstm, fc_w=fc_w_t, fc_b=fc_b)


# --------------------------------- forward pass ---------------------------------
@functools.partial(jax.jit, static_argnames=("num_classes",))
def lstm_model_forward(x_bti, prep, *, num_classes):
    """x_bti: (B, T, input_size), batch_first like the PyTorch module."""
    B, T, I = x_bti.shape
    Bp = max(8, ((B + 7) // 8) * 8)          # pad batch up to full sublanes
    H = prep["lstm"][0]["whh_t"].shape[0]
    C_pad = prep["fc_w"].shape[1]
    num_layers = len(prep["lstm"])

    x_tbi = jnp.transpose(x_bti, (1, 0, 2)).astype(jnp.float32)   # (T, B, I)
    if Bp != B:
        x_tbi = jnp.pad(x_tbi, ((0, 0), (0, Bp - B), (0, 0)))
    x_flat = x_tbi.reshape(T * Bp, I)                             # time-major, flattened

    args = [x_flat]
    for layer in prep["lstm"]:
        args += [layer["wih_t"], layer["whh_t"], layer["b"]]
    args += [prep["fc_w"], prep["fc_b"]]

    out_pad = pl.pallas_call(
        _make_fused_kernel(num_layers, T, Bp, H),
        out_shape=jax.ShapeDtypeStruct((Bp, C_pad), jnp.float32),
        scratch_shapes=[pltpu.VMEM((T * Bp, H), jnp.float32)],    # inter-layer h sequence
    )(*args)
    return out_pad[:B, :num_classes]


# ----------------------------------- init -----------------------------------
def init_params(key, input_size, hidden_size, num_layers, num_classes):
    """Deterministic init mimicking PyTorch's U(-1/sqrt(H), 1/sqrt(H))."""
    k = 1.0 / jnp.sqrt(hidden_size)
    layers = []
    for layer_idx in range(num_layers):
        in_sz = input_size if layer_idx == 0 else hidden_size
        key, k1, k2, k3, k4 = jax.random.split(key, 5)
        layers.append(dict(
            w_ih=jax.random.uniform(k1, (4 * hidden_size, in_sz), jnp.float32, -k, k),
            w_hh=jax.random.uniform(k2, (4 * hidden_size, hidden_size), jnp.float32, -k, k),
            b_ih=jax.random.uniform(k3, (4 * hidden_size,), jnp.float32, -k, k),
            b_hh=jax.random.uniform(k4, (4 * hidden_size,), jnp.float32, -k, k),
        ))
    key, k5, k6 = jax.random.split(key, 3)
    kf = 1.0 / jnp.sqrt(hidden_size)
    return dict(
        lstm=layers,
        fc_w=jax.random.uniform(k5, (num_classes, hidden_size), jnp.float32, -kf, kf),
        fc_b=jax.random.uniform(k6, (num_classes,), jnp.float32, -kf, kf),
    )


if __name__ == "__main__":
    batch, seq_len = 2, 8
    input_size, hidden_size, num_layers, num_classes = 16, 32, 2, 4
    dropout_rate = 0.1  # eval-mode -> identity

    key = jax.random.PRNGKey(0)
    key, xk, pk = jax.random.split(key, 3)
    x = jax.random.normal(xk, (batch, seq_len, input_size), jnp.float32)
    params = init_params(pk, input_size, hidden_size, num_layers, num_classes)
    prep = prepare_params(params)

    out = lstm_model_forward(x, prep, num_classes=num_classes)
    jax.block_until_ready(out)
    assert out.shape == (batch, num_classes), out.shape

    # Pure-JAX reference (identical math, highest-precision matmuls) for correctness.
    def reference_forward(xb, p):
        hseq = jnp.transpose(xb.astype(jnp.float32), (1, 0, 2))   # (T, B, I)
        for layer in p["lstm"]:
            Hh = layer["w_hh"].shape[1]
            h = jnp.zeros((xb.shape[0], Hh), jnp.float32)
            c = jnp.zeros((xb.shape[0], Hh), jnp.float32)
            outs = []
            for t in range(hseq.shape[0]):
                g = (jnp.dot(hseq[t], layer["w_ih"].T) + layer["b_ih"]
                     + jnp.dot(h, layer["w_hh"].T) + layer["b_hh"])
                i_g = jax.nn.sigmoid(g[:, 0:Hh])
                f_g = jax.nn.sigmoid(g[:, Hh:2 * Hh])
                g_g = jnp.tanh(g[:, 2 * Hh:3 * Hh])
                o_g = jax.nn.sigmoid(g[:, 3 * Hh:4 * Hh])
                c = f_g * c + i_g * g_g
                h = o_g * jnp.tanh(c)
                outs.append(h)
            hseq = jnp.stack(outs)
        return jnp.dot(hseq[-1], p["fc_w"].T) + p["fc_b"]

    with jax.default_matmul_precision("highest"):
        ref = reference_forward(x, params)
    err = float(jnp.max(jnp.abs(out - ref)))
    assert err < 1e-3, f"max abs err {err}"
    print("KERNEL_OK")
</pallas_src>

<mosaic_0001>
module attributes {stable_mosaic.version = 11 : i64} {
  func.func @kernel(%arg0: memref<64x16xf32, #tpu.memory_space<vmem>>, %arg1: memref<16x128xf32, #tpu.memory_space<vmem>>, %arg2: memref<32x128xf32, #tpu.memory_space<vmem>>, %arg3: memref<1x128xf32, #tpu.memory_space<vmem>>, %arg4: memref<32x128xf32, #tpu.memory_space<vmem>>, %arg5: memref<32x128xf32, #tpu.memory_space<vmem>>, %arg6: memref<1x128xf32, #tpu.memory_space<vmem>>, %arg7: memref<32x128xf32, #tpu.memory_space<vmem>>, %arg8: memref<1x128xf32, #tpu.memory_space<vmem>>, %arg9: memref<8x128xf32, #tpu.memory_space<vmem>>, %arg10: memref<64x32xf32, #tpu.memory_space<vmem>>) attributes {dimension_semantics = [], scalar_prefetch = 0 : i64, scratch_operands = 1 : i64, tpu.core_type = #tpu.core_type<tc>} {
    %c0 = arith.constant 0 : index
    %c0_0 = arith.constant 0 : index
    %0 = vector.load %arg0[%c0, %c0_0] : memref<64x16xf32, #tpu.memory_space<vmem>>, vector<64x16xf32>
    %c0_1 = arith.constant 0 : index
    %c0_2 = arith.constant 0 : index
    %1 = vector.load %arg1[%c0_1, %c0_2] : memref<16x128xf32, #tpu.memory_space<vmem>>, vector<16x128xf32>
    %c0_3 = arith.constant 0 : index
    %c0_4 = arith.constant 0 : index
    %2 = vector.load %arg2[%c0_3, %c0_4] : memref<32x128xf32, #tpu.memory_space<vmem>>, vector<32x128xf32>
    %c0_5 = arith.constant 0 : index
    %c0_6 = arith.constant 0 : index
    %3 = vector.load %arg3[%c0_5, %c0_6] : memref<1x128xf32, #tpu.memory_space<vmem>>, vector<1x128xf32>
    %cst = arith.constant dense<0.000000e+00> : vector<64x128xf32>
    %4 = tpu.matmul %0, %1, %cst {dimension_numbers = #tpu.dot_dimension_numbers<[1], [0], [0], [1], [0, 0, 1, 1], [], []>} : vector<64x16xf32>, vector<16x128xf32>, vector<64x128xf32> -> vector<64x128xf32>
    %5 = vector.broadcast %3 : vector<1x128xf32> to vector<64x128xf32>
    %6 = arith.addf %4, %5 : vector<64x128xf32>
    %cst_7 = arith.constant 0.000000e+00 : f32
    %7 = vector.broadcast %cst_7 : f32 to vector<8x32xf32>
    %cst_8 = arith.constant 0.000000e+00 : f32
    %8 = vector.broadcast %cst_8 : f32 to vector<8x32xf32>
    %9 = vector.extract_strided_slice %6 {offsets = [0, 0], sizes = [8, 128], strides = [1, 1]} : vector<64x128xf32> to vector<8x128xf32>
    %cst_9 = arith.constant dense<0.000000e+00> : vector<8x128xf32>
    %10 = tpu.matmul %7, %2, %cst_9 {dimension_numbers = #tpu.dot_dimension_numbers<[1], [0], [0], [1], [0, 0, 1, 1], [], []>} : vector<8x32xf32>, vector<32x128xf32>, vector<8x128xf32> -> vector<8x128xf32>
    %11 = arith.addf %9, %10 : vector<8x128xf32>
    %12 = arith.negf %11 : vector<8x128xf32>
    %13 = math.exp %12 : vector<8x128xf32>
    %cst_10 = arith.constant 1.000000e+00 : f32
    %14 = vector.broadcast %cst_10 : f32 to vector<8x128xf32>
    %15 = arith.addf %14, %13 : vector<8x128xf32>
    %16 = arith.divf %14, %15 : vector<8x128xf32>
    %17 = math.tanh %11 : vector<8x128xf32>
    %18 = vector.extract_strided_slice %16 {offsets = [0, 0], sizes = [8, 32], strides = [1, 1]} : vector<8x128xf32> to vector<8x32xf32>
    %19 = vector.extract_strided_slice %16 {offsets = [0, 32], sizes = [8, 32], strides = [1, 1]} : vector<8x128xf32> to vector<8x32xf32>
    %20 = vector.extract_strided_slice %17 {offsets = [0, 64], sizes = [8, 32], strides = [1, 1]} : vector<8x128xf32> to vector<8x32xf32>
    %21 = vector.extract_strided_slice %16 {offsets = [0, 96], sizes = [8, 32], strides = [1, 1]} : vector<8x128xf32> to vector<8x32xf32>
    %22 = arith.mulf %19, %8 : vector<8x32xf32>
    %23 = arith.mulf %18, %20 : vector<8x32xf32>
    %24 = arith.addf %22, %23 : vector<8x32xf32>
    %25 = math.tanh %24 : vector<8x32xf32>
    %26 = arith.mulf %21, %25 : vector<8x32xf32>
    %c0_11 = arith.constant 0 : index
    %c0_12 = arith.constant 0 : index
    %27 = vector.load %arg10[%c0_11, %c0_12] : memref<64x32xf32, #tpu.memory_space<vmem>>, vector<8x32xf32>
    tpu.vector_store %arg10[%c0_11, %c0_12], %26 {strides = array<i32>} : memref<64x32xf32, #tpu.memory_space<vmem>>, vector<8x32xf32>,
    %28 = vector.extract_strided_slice %6 {offsets = [8, 0], sizes = [8, 128], strides = [1, 1]} : vector<64x128xf32> to vector<8x128xf32>
    %cst_13 = arith.constant dense<0.000000e+00> : vector<8x128xf32>
    %29 = tpu.matmul %26, %2, %cst_13 {dimension_numbers = #tpu.dot_dimension_numbers<[1], [0], [0], [1], [0, 0, 1, 1], [], []>} : vector<8x32xf32>, vector<32x128xf32>, vector<8x128xf32> -> vector<8x128xf32>
    %30 = arith.addf %28, %29 : vector<8x128xf32>
    %31 = arith.negf %30 : vector<8x128xf32>
    %32 = math.exp %31 : vector<8x128xf32>
    %cst_14 = arith.constant 1.000000e+00 : f32
    %33 = vector.broadcast %cst_14 : f32 to vector<8x128xf32>
    %34 = arith.addf %33, %32 : vector<8x128xf32>
    %35 = arith.divf %33, %34 : vector<8x128xf32>
    %36 = math.tanh %30 : vector<8x128xf32>
    %37 = vector.extract_strided_slice %35 {offsets = [0, 0], sizes = [8, 32], strides = [1, 1]} : vector<8x128xf32> to vector<8x32xf32>
    %38 = vector.extract_strided_slice %35 {offsets = [0, 32], sizes = [8, 32], strides = [1, 1]} : vector<8x128xf32> to vector<8x32xf32>
    %39 = vector.extract_strided_slice %36 {offsets = [0, 64], sizes = [8, 32], strides = [1, 1]} : vector<8x128xf32> to vector<8x32xf32>
    %40 = vector.extract_strided_slice %35 {offsets = [0, 96], sizes = [8, 32], strides = [1, 1]} : vector<8x128xf32> to vector<8x32xf32>
    %41 = arith.mulf %38, %24 : vector<8x32xf32>
    %42 = arith.mulf %37, %39 : vector<8x32xf32>
    %43 = arith.addf %41, %42 : vector<8x32xf32>
    %44 = math.tanh %43 : vector<8x32xf32>
    %45 = arith.mulf %40, %44 : vector<8x32xf32>
    %c8 = arith.constant 8 : index
    %c0_15 = arith.constant 0 : index
    %46 = vector.load %arg10[%c8, %c0_15] : memref<64x32xf32, #tpu.memory_space<vmem>>, vector<8x32xf32>
    tpu.vector_store %arg10[%c8, %c0_15], %45 {strides = array<i32>} : memref<64x32xf32, #tpu.memory_space<vmem>>, vector<8x32xf32>,
    %47 = vector.extract_strided_slice %6 {offsets = [16, 0], sizes = [8, 128], strides = [1, 1]} : vector<64x128xf32> to vector<8x128xf32>
    %cst_16 = arith.constant dense<0.000000e+00> : vector<8x128xf32>
    %48 = tpu.matmul %45, %2, %cst_16 {dimension_numbers = #tpu.dot_dimension_numbers<[1], [0], [0], [1], [0, 0, 1, 1], [], []>} : vector<8x32xf32>, vector<32x128xf32>, vector<8x128xf32> -> vector<8x128xf32>
    %49 = arith.addf %47, %48 : vector<8x128xf32>
    %50 = arith.negf %49 : vector<8x128xf32>
    %51 = math.exp %50 : vector<8x128xf32>
    %cst_17 = arith.constant 1.000000e+00 : f32
    %52 = vector.broadcast %cst_17 : f32 to vector<8x128xf32>
    %53 = arith.addf %52, %51 : vector<8x128xf32>
    %54 = arith.divf %52, %53 : vector<8x128xf32>
    %55 = math.tanh %49 : vector<8x128xf32>
    %56 = vector.extract_strided_slice %54 {offsets = [0, 0], sizes = [8, 32], strides = [1, 1]} : vector<8x128xf32> to vector<8x32xf32>
    %57 = vector.extract_strided_slice %54 {offsets = [0, 32], sizes = [8, 32], strides = [1, 1]} : vector<8x128xf32> to vector<8x32xf32>
    %58 = vector.extract_strided_slice %55 {offsets = [0, 64], sizes = [8, 32], strides = [1, 1]} : vector<8x128xf32> to vector<8x32xf32>
    %59 = vector.extract_strided_slice %54 {offsets = [0, 96], sizes = [8, 32], strides = [1, 1]} : vector<8x128xf32> to vector<8x32xf32>
    %60 = arith.mulf %57, %43 : vector<8x32xf32>
    %61 = arith.mulf %56, %58 : vector<8x32xf32>
    %62 = arith.addf %60, %61 : vector<8x32xf32>
    %63 = math.tanh %62 : vector<8x32xf32>
    %64 = arith.mulf %59, %63 : vector<8x32xf32>
    %c16 = arith.constant 16 : index
    %c0_18 = arith.constant 0 : index
    %65 = vector.load %arg10[%c16, %c0_18] : memref<64x32xf32, #tpu.memory_space<vmem>>, vector<8x32xf32>
    tpu.vector_store %arg10[%c16, %c0_18], %64 {strides = array<i32>} : memref<64x32xf32, #tpu.memory_space<vmem>>, vector<8x32xf32>,
    %66 = vector.extract_strided_slice %6 {offsets = [24, 0], sizes = [8, 128], strides = [1, 1]} : vector<64x128xf32> to vector<8x128xf32>
    %cst_19 = arith.constant dense<0.000000e+00> : vector<8x128xf32>
    %67 = tpu.matmul %64, %2, %cst_19 {dimension_numbers = #tpu.dot_dimension_numbers<[1], [0], [0], [1], [0, 0, 1, 1], [], []>} : vector<8x32xf32>, vector<32x128xf32>, vector<8x128xf32> -> vector<8x128xf32>
    %68 = arith.addf %66, %67 : vector<8x128xf32>
    %69 = arith.negf %68 : vector<8x128xf32>
    %70 = math.exp %69 : vector<8x128xf32>
    %cst_20 = arith.constant 1.000000e+00 : f32
    %71 = vector.broadcast %cst_20 : f32 to vector<8x128xf32>
    %72 = arith.addf %71, %70 : vector<8x128xf32>
    %73 = arith.divf %71, %72 : vector<8x128xf32>
    %74 = math.tanh %68 : vector<8x128xf32>
    %75 = vector.extract_strided_slice %73 {offsets = [0, 0], sizes = [8, 32], strides = [1, 1]} : vector<8x128xf32> to vector<8x32xf32>
    %76 = vector.extract_strided_slice %73 {offsets = [0, 32], sizes = [8, 32], strides = [1, 1]} : vector<8x128xf32> to vector<8x32xf32>
    %77 = vector.extract_strided_slice %74 {offsets = [0, 64], sizes = [8, 32], strides = [1, 1]} : vector<8x128xf32> to vector<8x32xf32>
    %78 = vector.extract_strided_slice %73 {offsets = [0, 96], sizes = [8, 32], strides = [1, 1]} : vector<8x128xf32> to vector<8x32xf32>
    %79 = arith.mulf %76, %62 : vector<8x32xf32>
    %80 = arith.mulf %75, %77 : vector<8x32xf32>
    %81 = arith.addf %79, %80 : vector<8x32xf32>
    %82 = math.tanh %81 : vector<8x32xf32>
    %83 = arith.mulf %78, %82 : vector<8x32xf32>
    %c24 = arith.constant 24 : index
    %c0_21 = arith.constant 0 : index
    %84 = vector.load %arg10[%c24, %c0_21] : memref<64x32xf32, #tpu.memory_space<vmem>>, vector<8x32xf32>
    tpu.vector_store %arg10[%c24, %c0_21], %83 {strides = array<i32>} : memref<64x32xf32, #tpu.memory_space<vmem>>, vector<8x32xf32>,
    %85 = vector.extract_strided_slice %6 {offsets = [32, 0], sizes = [8, 128], strides = [1, 1]} : vector<64x128xf32> to vector<8x128xf32>
    %cst_22 = arith.constant dense<0.000000e+00> : vector<8x128xf32>
    %86 = tpu.matmul %83, %2, %cst_22 {dimension_numbers = #tpu.dot_dimension_numbers<[1], [0], [0], [1], [0, 0, 1, 1], [], []>} : vector<8x32xf32>, vector<32x128xf32>, vector<8x128xf32> -> vector<8x128xf32>
    %87 = arith.addf %85, %86 : vector<8x128xf32>
    %88 = arith.negf %87 : vector<8x128xf32>
    %89 = math.exp %88 : vector<8x128xf32>
    %cst_23 = arith.constant 1.000000e+00 : f32
    %90 = vector.broadcast %cst_23 : f32 to vector<8x128xf32>
    %91 = arith.addf %90, %89 : vector<8x128xf32>
    %92 = arith.divf %90, %91 : vector<8x128xf32>
    %93 = math.tanh %87 : vector<8x128xf32>
    %94 = vector.extract_strided_slice %92 {offsets = [0, 0], sizes = [8, 32], strides = [1, 1]} : vector<8x128xf32> to vector<8x32xf32>
    %95 = vector.extract_strided_slice %92 {offsets = [0, 32], sizes = [8, 32], strides = [1, 1]} : vector<8x128xf32> to vector<8x32xf32>
    %96 = vector.extract_strided_slice %93 {offsets = [0, 64], sizes = [8, 32], strides = [1, 1]} : vector<8x128xf32> to vector<8x32xf32>
    %97 = vector.extract_strided_slice %92 {offsets = [0, 96], sizes = [8, 32], strides = [1, 1]} : vector<8x128xf32> to vector<8x32xf32>
    %98 = arith.mulf %95, %81 : vector<8x32xf32>
    %99 = arith.mulf %94, %96 : vector<8x32xf32>
    %100 = arith.addf %98, %99 : vector<8x32xf32>
    %101 = math.tanh %100 : vector<8x32xf32>
    %102 = arith.mulf %97, %101 : vector<8x32xf32>
    %c32 = arith.constant 32 : index
    %c0_24 = arith.constant 0 : index
    %103 = vector.load %arg10[%c32, %c0_24] : memref<64x32xf32, #tpu.memory_space<vmem>>, vector<8x32xf32>
    tpu.vector_store %arg10[%c32, %c0_24], %102 {strides = array<i32>} : memref<64x32xf32, #tpu.memory_space<vmem>>, vector<8x32xf32>,
    %104 = vector.extract_strided_slice %6 {offsets = [40, 0], sizes = [8, 128], strides = [1, 1]} : vector<64x128xf32> to vector<8x128xf32>
    %cst_25 = arith.constant dense<0.000000e+00> : vector<8x128xf32>
    %105 = tpu.matmul %102, %2, %cst_25 {dimension_numbers = #tpu.dot_dimension_numbers<[1], [0], [0], [1], [0, 0, 1, 1], [], []>} : vector<8x32xf32>, vector<32x128xf32>, vector<8x128xf32> -> vector<8x128xf32>
    %106 = arith.addf %104, %105 : vector<8x128xf32>
    %107 = arith.negf %106 : vector<8x128xf32>
    %108 = math.exp %107 : vector<8x128xf32>
    %cst_26 = arith.constant 1.000000e+00 : f32
    %109 = vector.broadcast %cst_26 : f32 to vector<8x128xf32>
    %110 = arith.addf %109, %108 : vector<8x128xf32>
    %111 = arith.divf %109, %110 : vector<8x128xf32>
    %112 = math.tanh %106 : vector<8x128xf32>
    %113 = vector.extract_strided_slice %111 {offsets = [0, 0], sizes = [8, 32], strides = [1, 1]} : vector<8x128xf32> to vector<8x32xf32>
    %114 = vector.extract_strided_slice %111 {offsets = [0, 32], sizes = [8, 32], strides = [1, 1]} : vector<8x128xf32> to vector<8x32xf32>
    %115 = vector.extract_strided_slice %112 {offsets = [0, 64], sizes = [8, 32], strides = [1, 1]} : vector<8x128xf32> to vector<8x32xf32>
    %116 = vector.extract_strided_slice %111 {offsets = [0, 96], sizes = [8, 32], strides = [1, 1]} : vector<8x128xf32> to vector<8x32xf32>
    %117 = arith.mulf %114, %100 : vector<8x32xf32>
    %118 = arith.mulf %113, %115 : vector<8x32xf32>
    %119 = arith.addf %117, %118 : vector<8x32xf32>
    %120 = math.tanh %119 : vector<8x32xf32>
    %121 = arith.mulf %116, %120 : vector<8x32xf32>
    %c40 = arith.constant 40 : index
    %c0_27 = arith.constant 0 : index
    %122 = vector.load %arg10[%c40, %c0_27] : memref<64x32xf32, #tpu.memory_space<vmem>>, vector<8x32xf32>
    tpu.vector_store %arg10[%c40, %c0_27], %121 {strides = array<i32>} : memref<64x32xf32, #tpu.memory_space<vmem>>, vector<8x32xf32>,
    %123 = vector.extract_strided_slice %6 {offsets = [48, 0], sizes = [8, 128], strides = [1, 1]} : vector<64x128xf32> to vector<8x128xf32>
    %cst_28 = arith.constant dense<0.000000e+00> : vector<8x128xf32>
    %124 = tpu.matmul %121, %2, %cst_28 {dimension_numbers = #tpu.dot_dimension_numbers<[1], [0], [0], [1], [0, 0, 1, 1], [], []>} : vector<8x32xf32>, vector<32x128xf32>, vector<8x128xf32> -> vector<8x128xf32>
    %125 = arith.addf %123, %124 : vector<8x128xf32>
    %126 = arith.negf %125 : vector<8x128xf32>
    %127 = math.exp %126 : vector<8x128xf32>
    %cst_29 = arith.constant 1.000000e+00 : f32
    %128 = vector.broadcast %cst_29 : f32 to vector<8x128xf32>
    %129 = arith.addf %128, %127 : vector<8x128xf32>
    %130 = arith.divf %128, %129 : vector<8x128xf32>
    %131 = math.tanh %125 : vector<8x128xf32>
    %132 = vector.extract_strided_slice %130 {offsets = [0, 0], sizes = [8, 32], strides = [1, 1]} : vector<8x128xf32> to vector<8x32xf32>
    %133 = vector.extract_strided_slice %130 {offsets = [0, 32], sizes = [8, 32], strides = [1, 1]} : vector<8x128xf32> to vector<8x32xf32>
    %134 = vector.extract_strided_slice %131 {offsets = [0, 64], sizes = [8, 32], strides = [1, 1]} : vector<8x128xf32> to vector<8x32xf32>
    %135 = vector.extract_strided_slice %130 {offsets = [0, 96], sizes = [8, 32], strides = [1, 1]} : vector<8x128xf32> to vector<8x32xf32>
    %136 = arith.mulf %133, %119 : vector<8x32xf32>
    %137 = arith.mulf %132, %134 : vector<8x32xf32>
    %138 = arith.addf %136, %137 : vector<8x32xf32>
    %139 = math.tanh %138 : vector<8x32xf32>
    %140 = arith.mulf %135, %139 : vector<8x32xf32>
    %c48 = arith.constant 48 : index
    %c0_30 = arith.constant 0 : index
    %141 = vector.load %arg10[%c48, %c0_30] : memref<64x32xf32, #tpu.memory_space<vmem>>, vector<8x32xf32>
    tpu.vector_store %arg10[%c48, %c0_30], %140 {strides = array<i32>} : memref<64x32xf32, #tpu.memory_space<vmem>>, vector<8x32xf32>,
    %142 = vector.extract_strided_slice %6 {offsets = [56, 0], sizes = [8, 128], strides = [1, 1]} : vector<64x128xf32> to vector<8x128xf32>
    %cst_31 = arith.constant dense<0.000000e+00> : vector<8x128xf32>
    %143 = tpu.matmul %140, %2, %cst_31 {dimension_numbers = #tpu.dot_dimension_numbers<[1], [0], [0], [1], [0, 0, 1, 1], [], []>} : vector<8x32xf32>, vector<32x128xf32>, vector<8x128xf32> -> vector<8x128xf32>
    %144 = arith.addf %142, %143 : vector<8x128xf32>
    %145 = arith.negf %144 : vector<8x128xf32>
    %146 = math.exp %145 : vector<8x128xf32>
    %cst_32 = arith.constant 1.000000e+00 : f32
    %147 = vector.broadcast %cst_32 : f32 to vector<8x128xf32>
    %148 = arith.addf %147, %146 : vector<8x128xf32>
    %149 = arith.divf %147, %148 : vector<8x128xf32>
    %150 = math.tanh %144 : vector<8x128xf32>
    %151 = vector.extract_strided_slice %149 {offsets = [0, 0], sizes = [8, 32], strides = [1, 1]} : vector<8x128xf32> to vector<8x32xf32>
    %152 = vector.extract_strided_slice %149 {offsets = [0, 32], sizes = [8, 32], strides = [1, 1]} : vector<8x128xf32> to vector<8x32xf32>
    %153 = vector.extract_strided_slice %150 {offsets = [0, 64], sizes = [8, 32], strides = [1, 1]} : vector<8x128xf32> to vector<8x32xf32>
    %154 = vector.extract_strided_slice %149 {offsets = [0, 96], sizes = [8, 32], strides = [1, 1]} : vector<8x128xf32> to vector<8x32xf32>
    %155 = arith.mulf %152, %138 : vector<8x32xf32>
    %156 = arith.mulf %151, %153 : vector<8x32xf32>
    %157 = arith.addf %155, %156 : vector<8x32xf32>
    %158 = math.tanh %157 : vector<8x32xf32>
    %159 = arith.mulf %154, %158 : vector<8x32xf32>
    %c56 = arith.constant 56 : index
    %c0_33 = arith.constant 0 : index
    %160 = vector.load %arg10[%c56, %c0_33] : memref<64x32xf32, #tpu.memory_space<vmem>>, vector<8x32xf32>
    tpu.vector_store %arg10[%c56, %c0_33], %159 {strides = array<i32>} : memref<64x32xf32, #tpu.memory_space<vmem>>, vector<8x32xf32>,
    %c0_34 = arith.constant 0 : index
    %c0_35 = arith.constant 0 : index
    %161 = vector.load %arg10[%c0_34, %c0_35] : memref<64x32xf32, #tpu.memory_space<vmem>>, vector<64x32xf32>
    %c0_36 = arith.constant 0 : index
    %c0_37 = arith.constant 0 : index
    %162 = vector.load %arg4[%c0_36, %c0_37] : memref<32x128xf32, #tpu.memory_space<vmem>>, vector<32x128xf32>
    %c0_38 = arith.constant 0 : index
    %c0_39 = arith.constant 0 : index
    %163 = vector.load %arg5[%c0_38, %c0_39] : memref<32x128xf32, #tpu.memory_space<vmem>>, vector<32x128xf32>
    %c0_40 = arith.constant 0 : index
    %c0_41 = arith.constant 0 : index
    %164 = vector.load %arg6[%c0_40, %c0_41] : memref<1x128xf32, #tpu.memory_space<vmem>>, vector<1x128xf32>
    %cst_42 = arith.constant dense<0.000000e+00> : vector<64x128xf32>
    %165 = tpu.matmul %161, %162, %cst_42 {dimension_numbers = #tpu.dot_dimension_numbers<[1], [0], [0], [1], [0, 0, 1, 1], [], []>} : vector<64x32xf32>, vector<32x128xf32>, vector<64x128xf32> -> vector<64x128xf32>
    %166 = vector.broadcast %164 : vector<1x128xf32> to vector<64x128xf32>
    %167 = arith.addf %165, %166 : vector<64x128xf32>
    %cst_43 = arith.constant 0.000000e+00 : f32
    %168 = vector.broadcast %cst_43 : f32 to vector<8x32xf32>
    %cst_44 = arith.constant 0.000000e+00 : f32
    %169 = vector.broadcast %cst_44 : f32 to vector<8x32xf32>
    %170 = vector.extract_strided_slice %167 {offsets = [0, 0], sizes = [8, 128], strides = [1, 1]} : vector<64x128xf32> to vector<8x128xf32>
    %cst_45 = arith.constant dense<0.000000e+00> : vector<8x128xf32>
    %171 = tpu.matmul %168, %163, %cst_45 {dimension_numbers = #tpu.dot_dimension_numbers<[1], [0], [0], [1], [0, 0, 1, 1], [], []>} : vector<8x32xf32>, vector<32x128xf32>, vector<8x128xf32> -> vector<8x128xf32>
    %172 = arith.addf %170, %171 : vector<8x128xf32>
    %173 = arith.negf %172 : vector<8x128xf32>
    %174 = math.exp %173 : vector<8x128xf32>
    %cst_46 = arith.constant 1.000000e+00 : f32
    %175 = vector.broadcast %cst_46 : f32 to vector<8x128xf32>
    %176 = arith.addf %175, %174 : vector<8x128xf32>
    %177 = arith.divf %175, %176 : vector<8x128xf32>
    %178 = math.tanh %172 : vector<8x128xf32>
    %179 = vector.extract_strided_slice %177 {offsets = [0, 0], sizes = [8, 32], strides = [1, 1]} : vector<8x128xf32> to vector<8x32xf32>
    %180 = vector.extract_strided_slice %177 {offsets = [0, 32], sizes = [8, 32], strides = [1, 1]} : vector<8x128xf32> to vector<8x32xf32>
    %181 = vector.extract_strided_slice %178 {offsets = [0, 64], sizes = [8, 32], strides = [1, 1]} : vector<8x128xf32> to vector<8x32xf32>
    %182 = vector.extract_strided_slice %177 {offsets = [0, 96], sizes = [8, 32], strides = [1, 1]} : vector<8x128xf32> to vector<8x32xf32>
    %183 = arith.mulf %180, %169 : vector<8x32xf32>
    %184 = arith.mulf %179, %181 : vector<8x32xf32>
    %185 = arith.addf %183, %184 : vector<8x32xf32>
    %186 = math.tanh %185 : vector<8x32xf32>
    %187 = arith.mulf %182, %186 : vector<8x32xf32>
    %188 = vector.extract_strided_slice %167 {offsets = [8, 0], sizes = [8, 128], strides = [1, 1]} : vector<64x128xf32> to vector<8x128xf32>
    %cst_47 = arith.constant dense<0.000000e+00> : vector<8x128xf32>
    %189 = tpu.matmul %187, %163, %cst_47 {dimension_numbers = #tpu.dot_dimension_numbers<[1], [0], [0], [1], [0, 0, 1, 1], [], []>} : vector<8x32xf32>, vector<32x128xf32>, vector<8x128xf32> -> vector<8x128xf32>
    %190 = arith.addf %188, %189 : vector<8x128xf32>
    %191 = arith.negf %190 : vector<8x128xf32>
    %192 = math.exp %191 : vector<8x128xf32>
    %cst_48 = arith.constant 1.000000e+00 : f32
    %193 = vector.broadcast %cst_48 : f32 to vector<8x128xf32>
    %194 = arith.addf %193, %192 : vector<8x128xf32>
    %195 = arith.divf %193, %194 : vector<8x128xf32>
    %196 = math.tanh %190 : vector<8x128xf32>
    %197 = vector.extract_strided_slice %195 {offsets = [0, 0], sizes = [8, 32], strides = [1, 1]} : vector<8x128xf32> to vector<8x32xf32>
    %198 = vector.extract_strided_slice %195 {offsets = [0, 32], sizes = [8, 32], strides = [1, 1]} : vector<8x128xf32> to vector<8x32xf32>
    %199 = vector.extract_strided_slice %196 {offsets = [0, 64], sizes = [8, 32], strides = [1, 1]} : vector<8x128xf32> to vector<8x32xf32>
    %200 = vector.extract_strided_slice %195 {offsets = [0, 96], sizes = [8, 32], strides = [1, 1]} : vector<8x128xf32> to vector<8x32xf32>
    %201 = arith.mulf %198, %185 : vector<8x32xf32>
    %202 = arith.mulf %197, %199 : vector<8x32xf32>
    %203 = arith.addf %201, %202 : vector<8x32xf32>
    %204 = math.tanh %203 : vector<8x32xf32>
    %205 = arith.mulf %200, %204 : vector<8x32xf32>
    %206 = vector.extract_strided_slice %167 {offsets = [16, 0], sizes = [8, 128], strides = [1, 1]} : vector<64x128xf32> to vector<8x128xf32>
    %cst_49 = arith.constant dense<0.000000e+00> : vector<8x128xf32>
    %207 = tpu.matmul %205, %163, %cst_49 {dimension_numbers = #tpu.dot_dimension_numbers<[1], [0], [0], [1], [0, 0, 1, 1], [], []>} : vector<8x32xf32>, vector<32x128xf32>, vector<8x128xf32> -> vector<8x128xf32>
    %208 = arith.addf %206, %207 : vector<8x128xf32>
    %209 = arith.negf %208 : vector<8x128xf32>
    %210 = math.exp %209 : vector<8x128xf32>
    %cst_50 = arith.constant 1.000000e+00 : f32
    %211 = vector.broadcast %cst_50 : f32 to vector<8x128xf32>
    %212 = arith.addf %211, %210 : vector<8x128xf32>
    %213 = arith.divf %211, %212 : vector<8x128xf32>
    %214 = math.tanh %208 : vector<8x128xf32>
    %215 = vector.extract_strided_slice %213 {offsets = [0, 0], sizes = [8, 32], strides = [1, 1]} : vector<8x128xf32> to vector<8x32xf32>
    %216 = vector.extract_strided_slice %213 {offsets = [0, 32], sizes = [8, 32], strides = [1, 1]} : vector<8x128xf32> to vector<8x32xf32>
    %217 = vector.extract_strided_slice %214 {offsets = [0, 64], sizes = [8, 32], strides = [1, 1]} : vector<8x128xf32> to vector<8x32xf32>
    %218 = vector.extract_strided_slice %213 {offsets = [0, 96], sizes = [8, 32], strides = [1, 1]} : vector<8x128xf32> to vector<8x32xf32>
    %219 = arith.mulf %216, %203 : vector<8x32xf32>
    %220 = arith.mulf %215, %217 : vector<8x32xf32>
    %221 = arith.addf %219, %220 : vector<8x32xf32>
    %222 = math.tanh %221 : vector<8x32xf32>
    %223 = arith.mulf %218, %222 : vector<8x32xf32>
    %224 = vector.extract_strided_slice %167 {offsets = [24, 0], sizes = [8, 128], strides = [1, 1]} : vector<64x128xf32> to vector<8x128xf32>
    %cst_51 = arith.constant dense<0.000000e+00> : vector<8x128xf32>
    %225 = tpu.matmul %223, %163, %cst_51 {dimension_numbers = #tpu.dot_dimension_numbers<[1], [0], [0], [1], [0, 0, 1, 1], [], []>} : vector<8x32xf32>, vector<32x128xf32>, vector<8x128xf32> -> vector<8x128xf32>
    %226 = arith.addf %224, %225 : vector<8x128xf32>
    %227 = arith.negf %226 : vector<8x128xf32>
    %228 = math.exp %227 : vector<8x128xf32>
    %cst_52 = arith.constant 1.000000e+00 : f32
    %229 = vector.broadcast %cst_52 : f32 to vector<8x128xf32>
    %230 = arith.addf %229, %228 : vector<8x128xf32>
    %231 = arith.divf %229, %230 : vector<8x128xf32>
    %232 = math.tanh %226 : vector<8x128xf32>
    %233 = vector.extract_strided_slice %231 {offsets = [0, 0], sizes = [8, 32], strides = [1, 1]} : vector<8x128xf32> to vector<8x32xf32>
    %234 = vector.extract_strided_slice %231 {offsets = [0, 32], sizes = [8, 32], strides = [1, 1]} : vector<8x128xf32> to vector<8x32xf32>
    %235 = vector.extract_strided_slice %232 {offsets = [0, 64], sizes = [8, 32], strides = [1, 1]} : vector<8x128xf32> to vector<8x32xf32>
    %236 = vector.extract_strided_slice %231 {offsets = [0, 96], sizes = [8, 32], strides = [1, 1]} : vector<8x128xf32> to vector<8x32xf32>
    %237 = arith.mulf %234, %221 : vector<8x32xf32>
    %238 = arith.mulf %233, %235 : vector<8x32xf32>
    %239 = arith.addf %237, %238 : vector<8x32xf32>
    %240 = math.tanh %239 : vector<8x32xf32>
    %241 = arith.mulf %236, %240 : vector<8x32xf32>
    %242 = vector.extract_strided_slice %167 {offsets = [32, 0], sizes = [8, 128], strides = [1, 1]} : vector<64x128xf32> to vector<8x128xf32>
    %cst_53 = arith.constant dense<0.000000e+00> : vector<8x128xf32>
    %243 = tpu.matmul %241, %163, %cst_53 {dimension_numbers = #tpu.dot_dimension_numbers<[1], [0], [0], [1], [0, 0, 1, 1], [], []>} : vector<8x32xf32>, vector<32x128xf32>, vector<8x128xf32> -> vector<8x128xf32>
    %244 = arith.addf %242, %243 : vector<8x128xf32>
    %245 = arith.negf %244 : vector<8x128xf32>
    %246 = math.exp %245 : vector<8x128xf32>
    %cst_54 = arith.constant 1.000000e+00 : f32
    %247 = vector.broadcast %cst_54 : f32 to vector<8x128xf32>
    %248 = arith.addf %247, %246 : vector<8x128xf32>
    %249 = arith.divf %247, %248 : vector<8x128xf32>
    %250 = math.tanh %244 : vector<8x128xf32>
    %251 = vector.extract_strided_slice %249 {offsets = [0, 0], sizes = [8, 32], strides = [1, 1]} : vector<8x128xf32> to vector<8x32xf32>
    %252 = vector.extract_strided_slice %249 {offsets = [0, 32], sizes = [8, 32], strides = [1, 1]} : vector<8x128xf32> to vector<8x32xf32>
    %253 = vector.extract_strided_slice %250 {offsets = [0, 64], sizes = [8, 32], strides = [1, 1]} : vector<8x128xf32> to vector<8x32xf32>
    %254 = vector.extract_strided_slice %249 {offsets = [0, 96], sizes = [8, 32], strides = [1, 1]} : vector<8x128xf32> to vector<8x32xf32>
    %255 = arith.mulf %252, %239 : vector<8x32xf32>
    %256 = arith.mulf %251, %253 : vector<8x32xf32>
    %257 = arith.addf %255, %256 : vector<8x32xf32>
    %258 = math.tanh %257 : vector<8x32xf32>
    %259 = arith.mulf %254, %258 : vector<8x32xf32>
    %260 = vector.extract_strided_slice %167 {offsets = [40, 0], sizes = [8, 128], strides = [1, 1]} : vector<64x128xf32> to vector<8x128xf32>
    %cst_55 = arith.constant dense<0.000000e+00> : vector<8x128xf32>
    %261 = tpu.matmul %259, %163, %cst_55 {dimension_numbers = #tpu.dot_dimension_numbers<[1], [0], [0], [1], [0, 0, 1, 1], [], []>} : vector<8x32xf32>, vector<32x128xf32>, vector<8x128xf32> -> vector<8x128xf32>
    %262 = arith.addf %260, %261 : vector<8x128xf32>
    %263 = arith.negf %262 : vector<8x128xf32>
    %264 = math.exp %263 : vector<8x128xf32>
    %cst_56 = arith.constant 1.000000e+00 : f32
    %265 = vector.broadcast %cst_56 : f32 to vector<8x128xf32>
    %266 = arith.addf %265, %264 : vector<8x128xf32>
    %267 = arith.divf %265, %266 : vector<8x128xf32>
    %268 = math.tanh %262 : vector<8x128xf32>
    %269 = vector.extract_strided_slice %267 {offsets = [0, 0], sizes = [8, 32], strides = [1, 1]} : vector<8x128xf32> to vector<8x32xf32>
    %270 = vector.extract_strided_slice %267 {offsets = [0, 32], sizes = [8, 32], strides = [1, 1]} : vector<8x128xf32> to vector<8x32xf32>
    %271 = vector.extract_strided_slice %268 {offsets = [0, 64], sizes = [8, 32], strides = [1, 1]} : vector<8x128xf32> to vector<8x32xf32>
    %272 = vector.extract_strided_slice %267 {offsets = [0, 96], sizes = [8, 32], strides = [1, 1]} : vector<8x128xf32> to vector<8x32xf32>
    %273 = arith.mulf %270, %257 : vector<8x32xf32>
    %274 = arith.mulf %269, %271 : vector<8x32xf32>
    %275 = arith.addf %273, %274 : vector<8x32xf32>
    %276 = math.tanh %275 : vector<8x32xf32>
    %277 = arith.mulf %272, %276 : vector<8x32xf32>
    %278 = vector.extract_strided_slice %167 {offsets = [48, 0], sizes = [8, 128], strides = [1, 1]} : vector<64x128xf32> to vector<8x128xf32>
    %cst_57 = arith.constant dense<0.000000e+00> : vector<8x128xf32>
    %279 = tpu.matmul %277, %163, %cst_57 {dimension_numbers = #tpu.dot_dimension_numbers<[1], [0], [0], [1], [0, 0, 1, 1], [], []>} : vector<8x32xf32>, vector<32x128xf32>, vector<8x128xf32> -> vector<8x128xf32>
    %280 = arith.addf %278, %279 : vector<8x128xf32>
    %281 = arith.negf %280 : vector<8x128xf32>
    %282 = math.exp %281 : vector<8x128xf32>
    %cst_58 = arith.constant 1.000000e+00 : f32
    %283 = vector.broadcast %cst_58 : f32 to vector<8x128xf32>
    %284 = arith.addf %283, %282 : vector<8x128xf32>
    %285 = arith.divf %283, %284 : vector<8x128xf32>
    %286 = math.tanh %280 : vector<8x128xf32>
    %287 = vector.extract_strided_slice %285 {offsets = [0, 0], sizes = [8, 32], strides = [1, 1]} : vector<8x128xf32> to vector<8x32xf32>
    %288 = vector.extract_strided_slice %285 {offsets = [0, 32], sizes = [8, 32], strides = [1, 1]} : vector<8x128xf32> to vector<8x32xf32>
    %289 = vector.extract_strided_slice %286 {offsets = [0, 64], sizes = [8, 32], strides = [1, 1]} : vector<8x128xf32> to vector<8x32xf32>
    %290 = vector.extract_strided_slice %285 {offsets = [0, 96], sizes = [8, 32], strides = [1, 1]} : vector<8x128xf32> to vector<8x32xf32>
    %291 = arith.mulf %288, %275 : vector<8x32xf32>
    %292 = arith.mulf %287, %289 : vector<8x32xf32>
    %293 = arith.addf %291, %292 : vector<8x32xf32>
    %294 = math.tanh %293 : vector<8x32xf32>
    %295 = arith.mulf %290, %294 : vector<8x32xf32>
    %296 = vector.extract_strided_slice %167 {offsets = [56, 0], sizes = [8, 128], strides = [1, 1]} : vector<64x128xf32> to vector<8x128xf32>
    %cst_59 = arith.constant dense<0.000000e+00> : vector<8x128xf32>
    %297 = tpu.matmul %295, %163, %cst_59 {dimension_numbers = #tpu.dot_dimension_numbers<[1], [0], [0], [1], [0, 0, 1, 1], [], []>} : vector<8x32xf32>, vector<32x128xf32>, vector<8x128xf32> -> vector<8x128xf32>
    %298 = arith.addf %296, %297 : vector<8x128xf32>
    %299 = arith.negf %298 : vector<8x128xf32>
    %300 = math.exp %299 : vector<8x128xf32>
    %cst_60 = arith.constant 1.000000e+00 : f32
    %301 = vector.broadcast %cst_60 : f32 to vector<8x128xf32>
    %302 = arith.addf %301, %300 : vector<8x128xf32>
    %303 = arith.divf %301, %302 : vector<8x128xf32>
    %304 = math.tanh %298 : vector<8x128xf32>
    %305 = vector.extract_strided_slice %303 {offsets = [0, 0], sizes = [8, 32], strides = [1, 1]} : vector<8x128xf32> to vector<8x32xf32>
    %306 = vector.extract_strided_slice %303 {offsets = [0, 32], sizes = [8, 32], strides = [1, 1]} : vector<8x128xf32> to vector<8x32xf32>
    %307 = vector.extract_strided_slice %304 {offsets = [0, 64], sizes = [8, 32], strides = [1, 1]} : vector<8x128xf32> to vector<8x32xf32>
    %308 = vector.extract_strided_slice %303 {offsets = [0, 96], sizes = [8, 32], strides = [1, 1]} : vector<8x128xf32> to vector<8x32xf32>
    %309 = arith.mulf %306, %293 : vector<8x32xf32>
    %310 = arith.mulf %305, %307 : vector<8x32xf32>
    %311 = arith.addf %309, %310 : vector<8x32xf32>
    %312 = math.tanh %311 : vector<8x32xf32>
    %313 = arith.mulf %308, %312 : vector<8x32xf32>
    %c0_61 = arith.constant 0 : index
    %c0_62 = arith.constant 0 : index
    %314 = vector.load %arg7[%c0_61, %c0_62] : memref<32x128xf32, #tpu.memory_space<vmem>>, vector<32x128xf32>
    %cst_63 = arith.constant dense<0.000000e+00> : vector<8x128xf32>
    %315 = tpu.matmul %313, %314, %cst_63 {dimension_numbers = #tpu.dot_dimension_numbers<[1], [0], [0], [1], [0, 0, 1, 1], [], []>} : vector<8x32xf32>, vector<32x128xf32>, vector<8x128xf32> -> vector<8x128xf32>
    %c0_64 = arith.constant 0 : index
    %c0_65 = arith.constant 0 : index
    %316 = vector.load %arg8[%c0_64, %c0_65] : memref<1x128xf32, #tpu.memory_space<vmem>>, vector<1x128xf32>
    %317 = vector.broadcast %316 : vector<1x128xf32> to vector<8x128xf32>
    %318 = arith.addf %315, %317 : vector<8x128xf32>
    %c0_66 = arith.constant 0 : index
    %c0_67 = arith.constant 0 : index
    %319 = vector.load %arg9[%c0_66, %c0_67] : memref<8x128xf32, #tpu.memory_space<vmem>>, vector<8x128xf32>
    tpu.vector_store %arg9[%c0_66, %c0_67], %318 {strides = array<i32>} : memref<8x128xf32, #tpu.memory_space<vmem>>, vector<8x128xf32>,
    return
  }
}

</mosaic_0001>

<llo_original>
// kernel: lstm_model_forward.1
$region0: #{lstm_model_forward.1}
  #allocation0 [shape = 'u32[]', space=smem, size = 0x4, offset = 0x4, fixed_abs, tag = 'smem constant byte address 0x4 - core index']
  #allocation1 [shape = 'u32[72,128]{1,0:T(1,128)}', space=vmem, size = 0x9000, scoped, tag = 'internal scratch']
  #allocation2 [shape = 'f32[64,32]{1,0:T(8,128)}', space=vmem, size = 0x8000, scoped, tag = 'scratch operand']
  %s0 = inlined_call_operand.vmem [shape: f32[64,16], index: 0, kind: input, shape index: {}]
  %s1 = inlined_call_operand.vmem [shape: f32[16,128], index: 1, kind: input, shape index: {}]
  %s2 = inlined_call_operand.vmem [shape: f32[32,128], index: 2, kind: input, shape index: {}]
  %s3 = inlined_call_operand.vmem [shape: f32[1,128], index: 3, kind: input, shape index: {}]
  %s4 = inlined_call_operand.vmem [shape: f32[32,128], index: 4, kind: input, shape index: {}]
  %s5 = inlined_call_operand.vmem [shape: f32[32,128], index: 5, kind: input, shape index: {}]
  %s6 = inlined_call_operand.vmem [shape: f32[1,128], index: 6, kind: input, shape index: {}]
  %s7 = inlined_call_operand.hbm [shape: f32[32,128], index: 7, kind: input, shape index: {}]
  %s8 = inlined_call_operand.hbm [shape: f32[1,128], index: 8, kind: input, shape index: {}]
  %s9 = inlined_call_operand.vmem [shape: f32[8,128], index: 9, kind: output, shape index: {}]
  %s10 = sld [smem:[#allocation0]]
  $region54: #{lstm_model_forward.1} parent=0
    _
  %s12 = ssub.s32 1, %s10
  %s13 = scalar_select 0, %s12, %s10
  $region1: #{lstm_model_forward.1} parent=0
    #allocation3 [shape = 'u8[16384]{0}', space=vmem, size = 0x4000, scoped, tag = 'input window, operand 7, single buffered']
    #allocation4 [shape = 's32[1]{0}', space=sflag, size = 0x4, scoped, tag = 'scoped memory for lstm_model_forward.1']
    #allocation5 [shape = 'u8[512]{0}', space=vmem, size = 0x400, scoped, tag = 'input window, operand 8, single buffered']
    #allocation6 [shape = 's32[1]{0}', space=sflag, size = 0x4, scoped, tag = 'scoped memory for lstm_model_forward.1']
    %14 = vsyncpa [#allocation4], 0
    %15 = vsyncpa [#allocation6], 0
    // Predicated region
    $region2: #{lstm_model_forward.1} parent=1 // pred_check
      _
    $region3: #{lstm_model_forward.1} parent=1 // pred_check_branch
      %17 = sbr.rel (0) target = $region5
    $region4: #{lstm_model_forward.1} parent=1 // pred_region
      _
    $region5: #{lstm_model_forward.1} parent=1 // pred_fallthru
      _
    // Predicated region
    $region6: #{lstm_model_forward.1} parent=1 // pred_check
      _
    $region7: #{lstm_model_forward.1} parent=1 // pred_check_branch
      %19 = sbr.rel (0) target = $region9
    $region8: #{lstm_model_forward.1} parent=1 // pred_region
      _
    $region9: #{lstm_model_forward.1} parent=1 // pred_fallthru
      _
    // Predicated region
    $region10: #{lstm_model_forward.1} parent=1 // pred_check
      _
    $region11: #{lstm_model_forward.1} parent=1 // pred_check_branch
      %21 = sbr.rel (0) target = $region13
    $region12: #{lstm_model_forward.1} parent=1 // pred_region
      _
    $region13: #{lstm_model_forward.1} parent=1 // pred_fallthru
      _
    // Predicated region
    $region14: #{lstm_model_forward.1} parent=1 // pred_check
      _
    $region15: #{lstm_model_forward.1} parent=1 // pred_check_branch
      %23 = sbr.rel (0) target = $region17
    $region16: #{lstm_model_forward.1} parent=1 // pred_region
      _
    $region17: #{lstm_model_forward.1} parent=1 // pred_fallthru
      _
    // Predicated region
    $region18: #{lstm_model_forward.1} parent=1 // pred_check
      _
    $region19: #{lstm_model_forward.1} parent=1 // pred_check_branch
      %25 = sbr.rel (0) target = $region21
    $region20: #{lstm_model_forward.1} parent=1 // pred_region
      _
    $region21: #{lstm_model_forward.1} parent=1 // pred_fallthru
      _
    // Predicated region
    $region22: #{lstm_model_forward.1} parent=1 // pred_check
      _
    $region23: #{lstm_model_forward.1} parent=1 // pred_check_branch
      %27 = sbr.rel (0) target = $region25
    $region24: #{lstm_model_forward.1} parent=1 // pred_region
      _
    $region25: #{lstm_model_forward.1} parent=1 // pred_fallthru
      _
    // Predicated region
    $region26: #{lstm_model_forward.1} parent=1 // pred_check
      _
    $region27: #{lstm_model_forward.1} parent=1 // pred_check_branch
      %29 = sbr.rel (0) target = $region29
    $region28: #{lstm_model_forward.1} parent=1 // pred_region
      _
    $region29: #{lstm_model_forward.1} parent=1 // pred_fallthru
      _
    // Predicated region
    $region30: #{lstm_model_forward.1} parent=1 // pred_check
      _
    $region31: #{lstm_model_forward.1} parent=1 // pred_check_branch
      %31 = sbr.rel (0) target = $region33
    $region32: #{lstm_model_forward.1} parent=1 // pred_region
      %33 = vsyncadd [#allocation4], 0
      %s34 = sshll.u32 %s7, 4
      %s35 = int_to_ptr.hbm [resolvable:$true] %s34
      %s36 = sshll.u32 [#allocation3], 4
      %s37 = int_to_ptr.vmem [resolvable:$true] %s36
      %42 = dma.hbm_to_vmem [thread:$0]  %s35, 512, %s37, [#allocation4], 128, 128, 8
    $region33: #{lstm_model_forward.1} parent=1 // pred_fallthru
      _
    // Predicated region
    $region34: #{lstm_model_forward.1} parent=1 // pred_check
      _
    $region35: #{lstm_model_forward.1} parent=1 // pred_check_branch
      %44 = sbr.rel (0) target = $region37
    $region36: #{lstm_model_forward.1} parent=1 // pred_region
      %46 = vsyncadd [#allocation6], 0
      %s48 = sshll.u32 %s8, 4
      %s49 = int_to_ptr.hbm [resolvable:$true] %s48
      %s50 = sshll.u32 [#allocation5], 4
      %s51 = int_to_ptr.vmem [resolvable:$true] %s50
      %53 = dma.hbm_to_vmem [thread:$0]  %s49, 16, %s51, [#allocation6]
    $region37: #{lstm_model_forward.1} parent=1 // pred_fallthru
      _
    // Predicated region
    $region38: #{lstm_model_forward.1} parent=1 // pred_check
      _
    $region39: #{lstm_model_forward.1} parent=1 // pred_check_branch
      %55 = sbr.rel (0) target = $region41
    $region40: #{lstm_model_forward.1} parent=1 // pred_region
      %57 = dma.done [#allocation4], 512
    $region41: #{lstm_model_forward.1} parent=1 // pred_fallthru
      _
    // Predicated region
    $region42: #{lstm_model_forward.1} parent=1 // pred_check
      _
    $region43: #{lstm_model_forward.1} parent=1 // pred_check_branch
      %59 = sbr.rel (0) target = $region45
    $region44: #{lstm_model_forward.1} parent=1 // pred_region
      %61 = dma.done [#allocation6], 16
    $region45: #{lstm_model_forward.1} parent=1 // pred_fallthru
      _
    %v62 = vld [vmem:[%s0] sm:$0xff]
    %v63 = vld [vmem:[%s0 + $0x8] sm:$0xff]
    %v64 = vld [vmem:[%s0 + $0x10] sm:$0xff]
    %v65 = vld [vmem:[%s0 + $0x18] sm:$0xff]
    %v66 = vld [vmem:[%s0 + $0x20] sm:$0xff]
    %v67 = vld [vmem:[%s0 + $0x28] sm:$0xff]
    %v68 = vld [vmem:[%s0 + $0x30] sm:$0xff]
    %v69 = vld [vmem:[%s0 + $0x38] sm:$0xff]
    %v70 = vld [vmem:[%s1] sm:$0xff]
    %v71 = vld [vmem:[%s1 + $0x8] sm:$0xff]
    %v72 = vld [vmem:[%s2] sm:$0xff]
    %v73 = vld [vmem:[%s2 + $0x8] sm:$0xff]
    %v74 = vld [vmem:[%s2 + $0x10] sm:$0xff]
    %v75 = vld [vmem:[%s2 + $0x18] sm:$0xff]
    %v76 = vld [vmem:[%s3] sm:$0x1]
    %v78 = vperm.slane %v76, 0
    %vm80 = vcmask 130048
    %v82 = vsel %vm80, %v62, 0
    %v85 = vsel %vm80, %v63, 0
    %v88 = vsel %vm80, %v64, 0
    %v91 = vsel %vm80, %v65, 0
    %v94 = vsel %vm80, %v66, 0
    %v97 = vsel %vm80, %v67, 0
    %v100 = vsel %vm80, %v68, 0
    %v103 = vsel %vm80, %v69, 0
    %105 = vmatpush.msra.mxu0 0.0
    %106 = vmatpush.msra.mxu0 0.0
    %107 = vmatpush.msra.mxu0 0.0
    %108 = vmatpush.msra.mxu0 0.0
    %109 = vmatpush.msra.mxu0 0.0
    %110 = vmatpush.msra.mxu0 0.0
    %111 = vmatpush.msra.mxu0 0.0
    %112 = vmatpush.msra.mxu0 0.0
    %113 = vmatpush.msra.mxu0 0.0
    %114 = vmatpush.msra.mxu0 0.0
    %115 = vmatpush.msra.mxu0 0.0
    %116 = vmatpush.msra.mxu0 0.0
    %117 = vmatpush.msra.mxu0 0.0
    %118 = vmatpush.msra.mxu0 0.0
    %119 = vmatpush.msra.mxu0 %v71
    %120 = vmatpush.msra.mxu0 %v70
    %121 = vmatmul.f32.gmra.mxu0 %v82
    %v122 = vpop.f32.mrf.mxu0
    %v123 = vadd.f32 %v78, %v122
    %124 = vmatmul.f32.gmra.mxu0 %v85
    %v125 = vpop.f32.mrf.mxu0
    %v126 = vadd.f32 %v78, %v125
    %127 = vmatmul.f32.gmra.mxu0 %v88
    %v128 = vpop.f32.mrf.mxu0
    %v129 = vadd.f32 %v78, %v128
    %130 = vmatmul.f32.gmra.mxu0 %v91
    %v131 = vpop.f32.mrf.mxu0
    %v132 = vadd.f32 %v78, %v131
    %133 = vmatmul.f32.gmra.mxu0 %v94
    %v134 = vpop.f32.mrf.mxu0
    %v135 = vadd.f32 %v78, %v134
    %136 = vmatmul.f32.gmra.mxu0 %v97
    %v137 = vpop.f32.mrf.mxu0
    %v138 = vadd.f32 %v78, %v137
    %139 = vmatmul.f32.gmra.mxu0 %v100
    %v140 = vpop.f32.mrf.mxu0
    %v141 = vadd.f32 %v78, %v140
    %142 = vmatmul.f32.gmra.mxu0 %v103
    %v143 = vpop.f32.mrf.mxu0
    %v144 = vadd.f32 %v78, %v143
    %145 = vdwg.mxu0
    %vm146 = vcmask 261120
    %v148 = vsel %vm146, 0.0, 0
    %150 = vmatpush.msra.mxu0 0.0
    %151 = vmatpush.msra.mxu0 0.0
    %152 = vmatpush.msra.mxu0 0.0
    %153 = vmatpush.msra.mxu0 0.0
    %154 = vmatpush.msra.mxu0 0.0
    %155 = vmatpush.msra.mxu0 0.0
    %156 = vmatpush.msra.mxu0 0.0
    %157 = vmatpush.msra.mxu0 0.0
    %158 = vmatpush.msra.mxu0 0.0
    %159 = vmatpush.msra.mxu0 0.0
    %160 = vmatpush.msra.mxu0 0.0
    %161 = vmatpush.msra.mxu0 0.0
    %162 = vmatpush.msra.mxu0 %v75
    %163 = vmatpush.msra.mxu0 %v74
    %164 = vmatpush.msra.mxu0 %v73
    %165 = vmatpush.msra.mxu0 %v72
    %166 = vmatmul.f32.gmra.mxu0 %v148
    %v167 = vpop.f32.mrf.mxu0
    %v168 = vadd.f32 0.0, %v167
    %169 = vdwg.mxu0
    %v170 = vadd.f32 %v123, %v168
    %v171 = vxor.u32 %v170, 2147483648
    %v172 = vmul.f32 %v171, 1.442695
    %v173 = vpow.pop %v172
    %v174 = vadd.f32 %v173, 1.0
    %v175 = vrcp.pop %v174
    %v176 = vmul.f32 %v174, %v175
    %v177 = vsub.f32 1.0, %v176
    %v178 = vmul.f32 %v175, %v177
    %v179 = vadd.f32 %v175, %v178
    %vm180 = vweird.f32 %v174
    %vm181 = vweird.f32 %v175
    %vm182 = vmor %vm180, %vm181
    %v183 = vsel %vm182, %v175, %v179
    %v184 = vand.u32 2147483647, %v174
    %vm185 = vcmp.eq.f32.partialorder %v184, 8.507059e+37
    %v186 = vand.u32 %v174, 2147483648
    %v187 = vor.u32 1.1754944e-38, %v186
    %v188 = vsel %vm185, %v187, %v183
    %v189 = vmul.f32 1.0, %v188
    %v190 = vtanh.pop %v170
    %v191 = vmul.f32 %v189, 0.0
    %193 = vrot.lane.b32.xlu0 %v190, 64
    %v194 = vpop.permute.xlu0 %193
    %v196 = vmul.f32 %v189, %v194
    %198 = vrot.lane.b32.xlu0 %v196, 32
    %v199 = vpop.permute.xlu0 %198
    %v201 = vadd.f32 %v191, %v199
    %v202 = vtanh.pop %v201
    %204 = vrot.lane.b32.xlu0 %v202, 64
    %v205 = vpop.permute.xlu0 %204
    %v207 = vmul.f32 %v189, %v205
    %209 = vrot.lane.b32.xlu0 %v207, 32
    %v210 = vpop.permute.xlu0 %209
    %212 = vst.msk [vmem:[#allocation2] sm:$0xff] %vm146, %v210
    %v213 = vsel %vm146, %v210, 0
    %215 = vmatpush.msra.mxu0 0.0
    %216 = vmatpush.msra.mxu0 0.0
    %217 = vmatpush.msra.mxu0 0.0
    %218 = vmatpush.msra.mxu0 0.0
    %219 = vmatpush.msra.mxu0 0.0
    %220 = vmatpush.msra.mxu0 0.0
    %221 = vmatpush.msra.mxu0 0.0
    %222 = vmatpush.msra.mxu0 0.0
    %223 = vmatpush.msra.mxu0 0.0
    %224 = vmatpush.msra.mxu0 0.0
    %225 = vmatpush.msra.mxu0 0.0
    %226 = vmatpush.msra.mxu0 0.0
    %227 = vmatpush.msra.mxu0 %v75
    %228 = vmatpush.msra.mxu0 %v74
    %229 = vmatpush.msra.mxu0 %v73
    %230 = vmatpush.msra.mxu0 %v72
    %231 = vmatmul.f32.gmra.mxu0 %v213
    %v232 = vpop.f32.mrf.mxu0
    %v233 = vadd.f32 0.0, %v232
    %234 = vdwg.mxu0
    %v235 = vadd.f32 %v126, %v233
    %v236 = vxor.u32 %v235, 2147483648
    %v237 = vmul.f32 %v236, 1.442695
    %v238 = vpow.pop %v237
    %v239 = vadd.f32 %v238, 1.0
    %v240 = vrcp.pop %v239
    %v241 = vmul.f32 %v239, %v240
    %v242 = vsub.f32 1.0, %v241
    %v243 = vmul.f32 %v240, %v242
    %v244 = vadd.f32 %v240, %v243
    %vm245 = vweird.f32 %v239
    %vm246 = vweird.f32 %v240
    %vm247 = vmor %vm245, %vm246
    %v248 = vsel %vm247, %v240, %v244
    %v249 = vand.u32 2147483647, %v239
    %vm250 = vcmp.eq.f32.partialorder %v249, 8.507059e+37
    %v251 = vand.u32 %v239, 2147483648
    %v252 = vor.u32 1.1754944e-38, %v251
    %v253 = vsel %vm250, %v252, %v248
    %v254 = vmul.f32 1.0, %v253
    %v255 = vtanh.pop %v235
    %v256 = vmul.f32 %v254, %v201
    %258 = vrot.lane.b32.xlu0 %v255, 64
    %v259 = vpop.permute.xlu0 %258
    %v261 = vmul.f32 %v254, %v259
    %263 = vrot.lane.b32.xlu0 %v261, 32
    %v264 = vpop.permute.xlu0 %263
    %v266 = vadd.f32 %v256, %v264
    %v267 = vtanh.pop %v266
    %269 = vrot.lane.b32.xlu0 %v267, 64
    %v270 = vpop.permute.xlu0 %269
    %v272 = vmul.f32 %v254, %v270
    %274 = vrot.lane.b32.xlu0 %v272, 32
    %v275 = vpop.permute.xlu0 %274
    %277 = vst.msk [vmem:[#allocation2 + $0x8] sm:$0xff] %vm146, %v275
    %v278 = vsel %vm146, %v275, 0
    %280 = vmatpush.msra.mxu0 0.0
    %281 = vmatpush.msra.mxu0 0.0
    %282 = vmatpush.msra.mxu0 0.0
    %283 = vmatpush.msra.mxu0 0.0
    %284 = vmatpush.msra.mxu0 0.0
    %285 = vmatpush.msra.mxu0 0.0
    %286 = vmatpush.msra.mxu0 0.0
    %287 = vmatpush.msra.mxu0 0.0
    %288 = vmatpush.msra.mxu0 0.0
    %289 = vmatpush.msra.mxu0 0.0
    %290 = vmatpush.msra.mxu0 0.0
    %291 = vmatpush.msra.mxu0 0.0
    %292 = vmatpush.msra.mxu0 %v75
    %293 = vmatpush.msra.mxu0 %v74
    %294 = vmatpush.msra.mxu0 %v73
    %295 = vmatpush.msra.mxu0 %v72
    %296 = vmatmul.f32.gmra.mxu0 %v278
    %v297 = vpop.f32.mrf.mxu0
    %v298 = vadd.f32 0.0, %v297
    %299 = vdwg.mxu0
    %v300 = vadd.f32 %v129, %v298
    %v301 = vxor.u32 %v300, 2147483648
    %v302 = vmul.f32 %v301, 1.442695
    %v303 = vpow.pop %v302
    %v304 = vadd.f32 %v303, 1.0
    %v305 = vrcp.pop %v304
    %v306 = vmul.f32 %v304, %v305
    %v307 = vsub.f32 1.0, %v306
    %v308 = vmul.f32 %v305, %v307
    %v309 = vadd.f32 %v305, %v308
    %vm310 = vweird.f32 %v304
    %vm311 = vweird.f32 %v305
    %vm312 = vmor %vm310, %vm311
    %v313 = vsel %vm312, %v305, %v309
    %v314 = vand.u32 2147483647, %v304
    %vm315 = vcmp.eq.f32.partialorder %v314, 8.507059e+37
    %v316 = vand.u32 %v304, 2147483648
    %v317 = vor.u32 1.1754944e-38, %v316
    %v318 = vsel %vm315, %v317, %v313
    %v319 = vmul.f32 1.0, %v318
    %v320 = vtanh.pop %v300
    %v321 = vmul.f32 %v319, %v266
    %323 = vrot.lane.b32.xlu0 %v320, 64
    %v324 = vpop.permute.xlu0 %323
    %v326 = vmul.f32 %v319, %v324
    %328 = vrot.lane.b32.xlu0 %v326, 32
    %v329 = vpop.permute.xlu0 %328
    %v331 = vadd.f32 %v321, %v329
    %v332 = vtanh.pop %v331
    %334 = vrot.lane.b32.xlu0 %v332, 64
    %v335 = vpop.permute.xlu0 %334
    %v337 = vmul.f32 %v319, %v335
    %339 = vrot.lane.b32.xlu0 %v337, 32
    %v340 = vpop.permute.xlu0 %339
    %342 = vst.msk [vmem:[#allocation2 + $0x10] sm:$0xff] %vm146, %v340
    %v343 = vsel %vm146, %v340, 0
    %345 = vmatpush.msra.mxu0 0.0
    %346 = vmatpush.msra.mxu0 0.0
    %347 = vmatpush.msra.mxu0 0.0
    %348 = vmatpush.msra.mxu0 0.0
    %349 = vmatpush.msra.mxu0 0.0
    %350 = vmatpush.msra.mxu0 0.0
    %351 = vmatpush.msra.mxu0 0.0
    %352 = vmatpush.msra.mxu0 0.0
    %353 = vmatpush.msra.mxu0 0.0
    %354 = vmatpush.msra.mxu0 0.0
    %355 = vmatpush.msra.mxu0 0.0
    %356 = vmatpush.msra.mxu0 0.0
    %357 = vmatpush.msra.mxu0 %v75
    %358 = vmatpush.msra.mxu0 %v74
    %359 = vmatpush.msra.mxu0 %v73
    %360 = vmatpush.msra.mxu0 %v72
    %361 = vmatmul.f32.gmra.mxu0 %v343
    %v362 = vpop.f32.mrf.mxu0
    %v363 = vadd.f32 0.0, %v362
    %364 = vdwg.mxu0
    %v365 = vadd.f32 %v132, %v363
    %v366 = vxor.u32 %v365, 2147483648
    %v367 = vmul.f32 %v366, 1.442695
    %v368 = vpow.pop %v367
    %v369 = vadd.f32 %v368, 1.0
    %v370 = vrcp.pop %v369
    %v371 = vmul.f32 %v369, %v370
    %v372 = vsub.f32 1.0, %v371
    %v373 = vmul.f32 %v370, %v372
    %v374 = vadd.f32 %v370, %v373
    %vm375 = vweird.f32 %v369
    %vm376 = vweird.f32 %v370
    %vm377 = vmor %vm375, %vm376
    %v378 = vsel %vm377, %v370, %v374
    %v379 = vand.u32 2147483647, %v369
    %vm380 = vcmp.eq.f32.partialorder %v379, 8.507059e+37
    %v381 = vand.u32 %v369, 2147483648
    %v382 = vor.u32 1.1754944e-38, %v381
    %v383 = vsel %vm380, %v382, %v378
    %v384 = vmul.f32 1.0, %v383
    %v385 = vtanh.pop %v365
    %v386 = vmul.f32 %v384, %v331
    %388 = vrot.lane.b32.xlu0 %v385, 64
    %v389 = vpop.permute.xlu0 %388
    %v391 = vmul.f32 %v384, %v389
    %393 = vrot.lane.b32.xlu0 %v391, 32
    %v394 = vpop.permute.xlu0 %393
    %v396 = vadd.f32 %v386, %v394
    %v397 = vtanh.pop %v396
    %399 = vrot.lane.b32.xlu0 %v397, 64
    %v400 = vpop.permute.xlu0 %399
    %v402 = vmul.f32 %v384, %v400
    %404 = vrot.lane.b32.xlu0 %v402, 32
    %v405 = vpop.permute.xlu0 %404
    %407 = vst.msk [vmem:[#allocation2 + $0x18] sm:$0xff] %vm146, %v405
    %v408 = vsel %vm146, %v405, 0
    %410 = vmatpush.msra.mxu0 0.0
    %411 = vmatpush.msra.mxu0 0.0
    %412 = vmatpush.msra.mxu0 0.0
    %413 = vmatpush.msra.mxu0 0.0
    %414 = vmatpush.msra.mxu0 0.0
    %415 = vmatpush.msra.mxu0 0.0
    %416 = vmatpush.msra.mxu0 0.0
    %417 = vmatpush.msra.mxu0 0.0
    %418 = vmatpush.msra.mxu0 0.0
    %419 = vmatpush.msra.mxu0 0.0
    %420 = vmatpush.msra.mxu0 0.0
    %421 = vmatpush.msra.mxu0 0.0
    %422 = vmatpush.msra.mxu0 %v75
    %423 = vmatpush.msra.mxu0 %v74
    %424 = vmatpush.msra.mxu0 %v73
    %425 = vmatpush.msra.mxu0 %v72
    %426 = vmatmul.f32.gmra.mxu0 %v408
    %v427 = vpop.f32.mrf.mxu0
    %v428 = vadd.f32 0.0, %v427
    %429 = vdwg.mxu0
    %v430 = vadd.f32 %v135, %v428
    %v431 = vxor.u32 %v430, 2147483648
    %v432 = vmul.f32 %v431, 1.442695
    %v433 = vpow.pop %v432
    %v434 = vadd.f32 %v433, 1.0
    %v435 = vrcp.pop %v434
    %v436 = vmul.f32 %v434, %v435
    %v437 = vsub.f32 1.0, %v436
    %v438 = vmul.f32 %v435, %v437
    %v439 = vadd.f32 %v435, %v438
    %vm440 = vweird.f32 %v434
    %vm441 = vweird.f32 %v435
    %vm442 = vmor %vm440, %vm441
    %v443 = vsel %vm442, %v435, %v439
    %v444 = vand.u32 2147483647, %v434
    %vm445 = vcmp.eq.f32.partialorder %v444, 8.507059e+37
    %v446 = vand.u32 %v434, 2147483648
    %v447 = vor.u32 1.1754944e-38, %v446
    %v448 = vsel %vm445, %v447, %v443
    %v449 = vmul.f32 1.0, %v448
    %v450 = vtanh.pop %v430
    %v451 = vmul.f32 %v449, %v396
    %453 = vrot.lane.b32.xlu0 %v450, 64
    %v454 = vpop.permute.xlu0 %453
    %v456 = vmul.f32 %v449, %v454
    %458 = vrot.lane.b32.xlu0 %v456, 32
    %v459 = vpop.permute.xlu0 %458
    %v461 = vadd.f32 %v451, %v459
    %v462 = vtanh.pop %v461
    %464 = vrot.lane.b32.xlu0 %v462, 64
    %v465 = vpop.permute.xlu0 %464
    %v467 = vmul.f32 %v449, %v465
    %469 = vrot.lane.b32.xlu0 %v467, 32
    %v470 = vpop.permute.xlu0 %469
    %472 = vst.msk [vmem:[#allocation2 + $0x20] sm:$0xff] %vm146, %v470
    %v473 = vsel %vm146, %v470, 0
    %475 = vmatpush.msra.mxu0 0.0
    %476 = vmatpush.msra.mxu0 0.0
    %477 = vmatpush.msra.mxu0 0.0
    %478 = vmatpush.msra.mxu0 0.0
    %479 = vmatpush.msra.mxu0 0.0
    %480 = vmatpush.msra.mxu0 0.0
    %481 = vmatpush.msra.mxu0 0.0
    %482 = vmatpush.msra.mxu0 0.0
    %483 = vmatpush.msra.mxu0 0.0
    %484 = vmatpush.msra.mxu0 0.0
    %485 = vmatpush.msra.mxu0 0.0
    %486 = vmatpush.msra.mxu0 0.0
    %487 = vmatpush.msra.mxu0 %v75
    %488 = vmatpush.msra.mxu0 %v74
    %489 = vmatpush.msra.mxu0 %v73
    %490 = vmatpush.msra.mxu0 %v72
    %491 = vmatmul.f32.gmra.mxu0 %v473
    %v492 = vpop.f32.mrf.mxu0
    %v493 = vadd.f32 0.0, %v492
    %494 = vdwg.mxu0
    %v495 = vadd.f32 %v138, %v493
    %v496 = vxor.u32 %v495, 2147483648
    %v497 = vmul.f32 %v496, 1.442695
    %v498 = vpow.pop %v497
    %v499 = vadd.f32 %v498, 1.0
    %v500 = vrcp.pop %v499
    %v501 = vmul.f32 %v499, %v500
    %v502 = vsub.f32 1.0, %v501
    %v503 = vmul.f32 %v500, %v502
    %v504 = vadd.f32 %v500, %v503
    %vm505 = vweird.f32 %v499
    %vm506 = vweird.f32 %v500
    %vm507 = vmor %vm505, %vm506
    %v508 = vsel %vm507, %v500, %v504
    %v509 = vand.u32 2147483647, %v499
    %vm510 = vcmp.eq.f32.partialorder %v509, 8.507059e+37
    %v511 = vand.u32 %v499, 2147483648
    %v512 = vor.u32 1.1754944e-38, %v511
    %v513 = vsel %vm510, %v512, %v508
    %v514 = vmul.f32 1.0, %v513
    %v515 = vtanh.pop %v495
    %v516 = vmul.f32 %v514, %v461
    %518 = vrot.lane.b32.xlu0 %v515, 64
    %v519 = vpop.permute.xlu0 %518
    %v521 = vmul.f32 %v514, %v519
    %523 = vrot.lane.b32.xlu0 %v521, 32
    %v524 = vpop.permute.xlu0 %523
    %v526 = vadd.f32 %v516, %v524
    %v527 = vtanh.pop %v526
    %529 = vrot.lane.b32.xlu0 %v527, 64
    %v530 = vpop.permute.xlu0 %529
    %v532 = vmul.f32 %v514, %v530
    %534 = vrot.lane.b32.xlu0 %v532, 32
    %v535 = vpop.permute.xlu0 %534
    %537 = vst.msk [vmem:[#allocation2 + $0x28] sm:$0xff] %vm146, %v535
    %v538 = vsel %vm146, %v535, 0
    %540 = vmatpush.msra.mxu0 0.0
    %541 = vmatpush.msra.mxu0 0.0
    %542 = vmatpush.msra.mxu0 0.0
    %543 = vmatpush.msra.mxu0 0.0
    %544 = vmatpush.msra.mxu0 0.0
    %545 = vmatpush.msra.mxu0 0.0
    %546 = vmatpush.msra.mxu0 0.0
    %547 = vmatpush.msra.mxu0 0.0
    %548 = vmatpush.msra.mxu0 0.0
    %549 = vmatpush.msra.mxu0 0.0
    %550 = vmatpush.msra.mxu0 0.0
    %551 = vmatpush.msra.mxu0 0.0
    %552 = vmatpush.msra.mxu0 %v75
    %553 = vmatpush.msra.mxu0 %v74
    %554 = vmatpush.msra.mxu0 %v73
    %555 = vmatpush.msra.mxu0 %v72
    %556 = vmatmul.f32.gmra.mxu0 %v538
    %v557 = vpop.f32.mrf.mxu0
    %v558 = vadd.f32 0.0, %v557
    %559 = vdwg.mxu0
    %v560 = vadd.f32 %v141, %v558
    %v561 = vxor.u32 %v560, 2147483648
    %v562 = vmul.f32 %v561, 1.442695
    %v563 = vpow.pop %v562
    %v564 = vadd.f32 %v563, 1.0
    %v565 = vrcp.pop %v564
    %v566 = vmul.f32 %v564, %v565
    %v567 = vsub.f32 1.0, %v566
    %v568 = vmul.f32 %v565, %v567
    %v569 = vadd.f32 %v565, %v568
    %vm570 = vweird.f32 %v564
    %vm571 = vweird.f32 %v565
    %vm572 = vmor %vm570, %vm571
    %v573 = vsel %vm572, %v565, %v569
    %v574 = vand.u32 2147483647, %v564
    %vm575 = vcmp.eq.f32.partialorder %v574, 8.507059e+37
    %v576 = vand.u32 %v564, 2147483648
    %v577 = vor.u32 1.1754944e-38, %v576
    %v578 = vsel %vm575, %v577, %v573
    %v579 = vmul.f32 1.0, %v578
    %v580 = vtanh.pop %v560
    %v581 = vmul.f32 %v579, %v526
    %583 = vrot.lane.b32.xlu0 %v580, 64
    %v584 = vpop.permute.xlu0 %583
    %v586 = vmul.f32 %v579, %v584
    %588 = vrot.lane.b32.xlu0 %v586, 32
    %v589 = vpop.permute.xlu0 %588
    %v591 = vadd.f32 %v581, %v589
    %v592 = vtanh.pop %v591
    %594 = vrot.lane.b32.xlu0 %v592, 64
    %v595 = vpop.permute.xlu0 %594
    %v597 = vmul.f32 %v579, %v595
    %599 = vrot.lane.b32.xlu0 %v597, 32
    %v600 = vpop.permute.xlu0 %599
    %602 = vst.msk [vmem:[#allocation2 + $0x30] sm:$0xff] %vm146, %v600
    %v603 = vsel %vm146, %v600, 0
    %605 = vmatpush.msra.mxu0 0.0
    %606 = vmatpush.msra.mxu0 0.0
    %607 = vmatpush.msra.mxu0 0.0
    %608 = vmatpush.msra.mxu0 0.0
    %609 = vmatpush.msra.mxu0 0.0
    %610 = vmatpush.msra.mxu0 0.0
    %611 = vmatpush.msra.mxu0 0.0
    %612 = vmatpush.msra.mxu0 0.0
    %613 = vmatpush.msra.mxu0 0.0
    %614 = vmatpush.msra.mxu0 0.0
    %615 = vmatpush.msra.mxu0 0.0
    %616 = vmatpush.msra.mxu0 0.0
    %617 = vmatpush.msra.mxu0 %v75
    %618 = vmatpush.msra.mxu0 %v74
    %619 = vmatpush.msra.mxu0 %v73
    %620 = vmatpush.msra.mxu0 %v72
    %621 = vmatmul.f32.gmra.mxu0 %v603
    %v622 = vpop.f32.mrf.mxu0
    %v623 = vadd.f32 0.0, %v622
    %624 = vdwg.mxu0
    %v625 = vadd.f32 %v144, %v623
    %v626 = vxor.u32 %v625, 2147483648
    %v627 = vmul.f32 %v626, 1.442695
    %v628 = vpow.pop %v627
    %v629 = vadd.f32 %v628, 1.0
    %v630 = vrcp.pop %v629
    %v631 = vmul.f32 %v629, %v630
    %v632 = vsub.f32 1.0, %v631
    %v633 = vmul.f32 %v630, %v632
    %v634 = vadd.f32 %v630, %v633
    %vm635 = vweird.f32 %v629
    %vm636 = vweird.f32 %v630
    %vm637 = vmor %vm635, %vm636
    %v638 = vsel %vm637, %v630, %v634
    %v639 = vand.u32 2147483647, %v629
    %vm640 = vcmp.eq.f32.partialorder %v639, 8.507059e+37
    %v641 = vand.u32 %v629, 2147483648
    %v642 = vor.u32 1.1754944e-38, %v641
    %v643 = vsel %vm640, %v642, %v638
    %v644 = vmul.f32 1.0, %v643
    %v645 = vtanh.pop %v625
    %v646 = vmul.f32 %v644, %v591
    %648 = vrot.lane.b32.xlu0 %v645, 64
    %v649 = vpop.permute.xlu0 %648
    %v651 = vmul.f32 %v644, %v649
    %653 = vrot.lane.b32.xlu0 %v651, 32
    %v654 = vpop.permute.xlu0 %653
    %v656 = vadd.f32 %v646, %v654
    %v657 = vtanh.pop %v656
    %659 = vrot.lane.b32.xlu0 %v657, 64
    %v660 = vpop.permute.xlu0 %659
    %v662 = vmul.f32 %v644, %v660
    %664 = vrot.lane.b32.xlu0 %v662, 32
    %v665 = vpop.permute.xlu0 %664
    %667 = vst.msk [vmem:[#allocation2 + $0x38] sm:$0xff] %vm146, %v665
    %v668 = vld [vmem:[#allocation2] sm:$0xff]
    %v669 = vld [vmem:[#allocation2 + $0x8] sm:$0xff]
    %v670 = vld [vmem:[#allocation2 + $0x10] sm:$0xff]
    %v671 = vld [vmem:[#allocation2 + $0x18] sm:$0xff]
    %v672 = vld [vmem:[#allocation2 + $0x20] sm:$0xff]
    %v673 = vld [vmem:[#allocation2 + $0x28] sm:$0xff]
    %v674 = vld [vmem:[#allocation2 + $0x30] sm:$0xff]
    %v675 = vld [vmem:[#allocation2 + $0x38] sm:$0xff]
    %v676 = vld [vmem:[%s4] sm:$0xff]
    %v677 = vld [vmem:[%s4 + $0x8] sm:$0xff]
    %v678 = vld [vmem:[%s4 + $0x10] sm:$0xff]
    %v679 = vld [vmem:[%s4 + $0x18] sm:$0xff]
    %v680 = vld [vmem:[%s5] sm:$0xff]
    %v681 = vld [vmem:[%s5 + $0x8] sm:$0xff]
    %v682 = vld [vmem:[%s5 + $0x10] sm:$0xff]
    %v683 = vld [vmem:[%s5 + $0x18] sm:$0xff]
    %v684 = vld [vmem:[%s6] sm:$0x1]
    %v686 = vperm.slane %v684, 0
    %v689 = vsel %vm146, %v668, 0
    %v692 = vsel %vm146, %v669, 0
    %v695 = vsel %vm146, %v670, 0
    %v698 = vsel %vm146, %v671, 0
    %v701 = vsel %vm146, %v672, 0
    %v704 = vsel %vm146, %v673, 0
    %v707 = vsel %vm146, %v674, 0
    %v710 = vsel %vm146, %v675, 0
    %712 = vmatpush.msra.mxu0 0.0
    %713 = vmatpush.msra.mxu0 0.0
    %714 = vmatpush.msra.mxu0 0.0
    %715 = vmatpush.msra.mxu0 0.0
    %716 = vmatpush.msra.mxu0 0.0
    %717 = vmatpush.msra.mxu0 0.0
    %718 = vmatpush.msra.mxu0 0.0
    %719 = vmatpush.msra.mxu0 0.0
    %720 = vmatpush.msra.mxu0 0.0
    %721 = vmatpush.msra.mxu0 0.0
    %722 = vmatpush.msra.mxu0 0.0
    %723 = vmatpush.msra.mxu0 0.0
    %724 = vmatpush.msra.mxu0 %v679
    %725 = vmatpush.msra.mxu0 %v678
    %726 = vmatpush.msra.mxu0 %v677
    %727 = vmatpush.msra.mxu0 %v676
    %728 = vmatmul.f32.gmra.mxu0 %v689
    %v729 = vpop.f32.mrf.mxu0
    %v730 = vadd.f32 %v686, %v729
    %731 = vmatmul.f32.gmra.mxu0 %v692
    %v732 = vpop.f32.mrf.mxu0
    %v733 = vadd.f32 %v686, %v732
    %734 = vmatmul.f32.gmra.mxu0 %v695
    %v735 = vpop.f32.mrf.mxu0
    %v736 = vadd.f32 %v686, %v735
    %737 = vmatmul.f32.gmra.mxu0 %v698
    %v738 = vpop.f32.mrf.mxu0
    %v739 = vadd.f32 %v686, %v738
    %740 = vmatmul.f32.gmra.mxu0 %v701
    %v741 = vpop.f32.mrf.mxu0
    %v742 = vadd.f32 %v686, %v741
    %743 = vmatmul.f32.gmra.mxu0 %v704
    %v744 = vpop.f32.mrf.mxu0
    %v745 = vadd.f32 %v686, %v744
    %746 = vmatmul.f32.gmra.mxu0 %v707
    %v747 = vpop.f32.mrf.mxu0
    %v748 = vadd.f32 %v686, %v747
    %749 = vmatmul.f32.gmra.mxu0 %v710
    %v750 = vpop.f32.mrf.mxu0
    %v751 = vadd.f32 %v686, %v750
    %752 = vdwg.mxu0
    %753 = vmatpush.msra.mxu0 0.0
    %754 = vmatpush.msra.mxu0 0.0
    %755 = vmatpush.msra.mxu0 0.0
    %756 = vmatpush.msra.mxu0 0.0
    %757 = vmatpush.msra.mxu0 0.0
    %758 = vmatpush.msra.mxu0 0.0
    %759 = vmatpush.msra.mxu0 0.0
    %760 = vmatpush.msra.mxu0 0.0
    %761 = vmatpush.msra.mxu0 0.0
    %762 = vmatpush.msra.mxu0 0.0
    %763 = vmatpush.msra.mxu0 0.0
    %764 = vmatpush.msra.mxu0 0.0
    %765 = vmatpush.msra.mxu0 %v683
    %766 = vmatpush.msra.mxu0 %v682
    %767 = vmatpush.msra.mxu0 %v681
    %768 = vmatpush.msra.mxu0 %v680
    %769 = vmatmul.f32.gmra.mxu0 %v148
    %v770 = vpop.f32.mrf.mxu0
    %v771 = vadd.f32 0.0, %v770
    %772 = vdwg.mxu0
    %v773 = vadd.f32 %v730, %v771
    %v774 = vxor.u32 %v773, 2147483648
    %v775 = vmul.f32 %v774, 1.442695
    %v776 = vpow.pop %v775
    %v777 = vadd.f32 %v776, 1.0
    %v778 = vrcp.pop %v777
    %v779 = vmul.f32 %v777, %v778
    %v780 = vsub.f32 1.0, %v779
    %v781 = vmul.f32 %v778, %v780
    %v782 = vadd.f32 %v778, %v781
    %vm783 = vweird.f32 %v777
    %vm784 = vweird.f32 %v778
    %vm785 = vmor %vm783, %vm784
    %v786 = vsel %vm785, %v778, %v782
    %v787 = vand.u32 2147483647, %v777
    %vm788 = vcmp.eq.f32.partialorder %v787, 8.507059e+37
    %v789 = vand.u32 %v777, 2147483648
    %v790 = vor.u32 1.1754944e-38, %v789
    %v791 = vsel %vm788, %v790, %v786
    %v792 = vmul.f32 1.0, %v791
    %v793 = vtanh.pop %v773
    %v794 = vmul.f32 %v792, 0.0
    %796 = vrot.lane.b32.xlu0 %v793, 64
    %v797 = vpop.permute.xlu0 %796
    %v799 = vmul.f32 %v792, %v797
    %801 = vrot.lane.b32.xlu0 %v799, 32
    %v802 = vpop.permute.xlu0 %801
    %v804 = vadd.f32 %v794, %v802
    %v805 = vtanh.pop %v804
    %807 = vrot.lane.b32.xlu0 %v805, 64
    %v808 = vpop.permute.xlu0 %807
    %v810 = vmul.f32 %v792, %v808
    %812 = vrot.lane.b32.xlu0 %v810, 32
    %v813 = vpop.permute.xlu0 %812
    %v814 = vsel %vm146, %v813, 0
    %816 = vmatpush.msra.mxu0 0.0
    %817 = vmatpush.msra.mxu0 0.0
    %818 = vmatpush.msra.mxu0 0.0
    %819 = vmatpush.msra.mxu0 0.0
    %820 = vmatpush.msra.mxu0 0.0
    %821 = vmatpush.msra.mxu0 0.0
    %822 = vmatpush.msra.mxu0 0.0
    %823 = vmatpush.msra.mxu0 0.0
    %824 = vmatpush.msra.mxu0 0.0
    %825 = vmatpush.msra.mxu0 0.0
    %826 = vmatpush.msra.mxu0 0.0
    %827 = vmatpush.msra.mxu0 0.0
    %828 = vmatpush.msra.mxu0 %v683
    %829 = vmatpush.msra.mxu0 %v682
    %830 = vmatpush.msra.mxu0 %v681
    %831 = vmatpush.msra.mxu0 %v680
    %832 = vmatmul.f32.gmra.mxu0 %v814
    %v833 = vpop.f32.mrf.mxu0
    %v834 = vadd.f32 0.0, %v833
    %835 = vdwg.mxu0
    %v836 = vadd.f32 %v733, %v834
    %v837 = vxor.u32 %v836, 2147483648
    %v838 = vmul.f32 %v837, 1.442695
    %v839 = vpow.pop %v838
    %v840 = vadd.f32 %v839, 1.0
    %v841 = vrcp.pop %v840
    %v842 = vmul.f32 %v840, %v841
    %v843 = vsub.f32 1.0, %v842
    %v844 = vmul.f32 %v841, %v843
    %v845 = vadd.f32 %v841, %v844
    %vm846 = vweird.f32 %v840
    %vm847 = vweird.f32 %v841
    %vm848 = vmor %vm846, %vm847
    %v849 = vsel %vm848, %v841, %v845
    %v850 = vand.u32 2147483647, %v840
    %vm851 = vcmp.eq.f32.partialorder %v850, 8.507059e+37
    %v852 = vand.u32 %v840, 2147483648
    %v853 = vor.u32 1.1754944e-38, %v852
    %v854 = vsel %vm851, %v853, %v849
    %v855 = vmul.f32 1.0, %v854
    %v856 = vtanh.pop %v836
    %v857 = vmul.f32 %v855, %v804
    %859 = vrot.lane.b32.xlu0 %v856, 64
    %v860 = vpop.permute.xlu0 %859
    %v862 = vmul.f32 %v855, %v860
    %864 = vrot.lane.b32.xlu0 %v862, 32
    %v865 = vpop.permute.xlu0 %864
    %v867 = vadd.f32 %v857, %v865
    %v868 = vtanh.pop %v867
    %870 = vrot.lane.b32.xlu0 %v868, 64
    %v871 = vpop.permute.xlu0 %870
    %v873 = vmul.f32 %v855, %v871
    %875 = vrot.lane.b32.xlu0 %v873, 32
    %v876 = vpop.permute.xlu0 %875
    %v877 = vsel %vm146, %v876, 0
    %879 = vmatpush.msra.mxu0 0.0
    %880 = vmatpush.msra.mxu0 0.0
    %881 = vmatpush.msra.mxu0 0.0
    %882 = vmatpush.msra.mxu0 0.0
    %883 = vmatpush.msra.mxu0 0.0
    %884 = vmatpush.msra.mxu0 0.0
    %885 = vmatpush.msra.mxu0 0.0
    %886 = vmatpush.msra.mxu0 0.0
    %887 = vmatpush.msra.mxu0 0.0
    %888 = vmatpush.msra.mxu0 0.0
    %889 = vmatpush.msra.mxu0 0.0
    %890 = vmatpush.msra.mxu0 0.0
    %891 = vmatpush.msra.mxu0 %v683
    %892 = vmatpush.msra.mxu0 %v682
    %893 = vmatpush.msra.mxu0 %v681
    %894 = vmatpush.msra.mxu0 %v680
    %895 = vmatmul.f32.gmra.mxu0 %v877
    %v896 = vpop.f32.mrf.mxu0
    %v897 = vadd.f32 0.0, %v896
    %898 = vdwg.mxu0
    %v899 = vadd.f32 %v736, %v897
    %v900 = vxor.u32 %v899, 2147483648
    %v901 = vmul.f32 %v900, 1.442695
    %v902 = vpow.pop %v901
    %v903 = vadd.f32 %v902, 1.0
    %v904 = vrcp.pop %v903
    %v905 = vmul.f32 %v903, %v904
    %v906 = vsub.f32 1.0, %v905
    %v907 = vmul.f32 %v904, %v906
    %v908 = vadd.f32 %v904, %v907
    %vm909 = vweird.f32 %v903
    %vm910 = vweird.f32 %v904
    %vm911 = vmor %vm909, %vm910
    %v912 = vsel %vm911, %v904, %v908
    %v913 = vand.u32 2147483647, %v903
    %vm914 = vcmp.eq.f32.partialorder %v913, 8.507059e+37
    %v915 = vand.u32 %v903, 2147483648
    %v916 = vor.u32 1.1754944e-38, %v915
    %v917 = vsel %vm914, %v916, %v912
    %v918 = vmul.f32 1.0, %v917
    %v919 = vtanh.pop %v899
    %v920 = vmul.f32 %v918, %v867
    %922 = vrot.lane.b32.xlu0 %v919, 64
    %v923 = vpop.permute.xlu0 %922
    %v925 = vmul.f32 %v918, %v923
    %927 = vrot.lane.b32.xlu0 %v925, 32
    %v928 = vpop.permute.xlu0 %927
    %v930 = vadd.f32 %v920, %v928
    %v931 = vtanh.pop %v930
    %933 = vrot.lane.b32.xlu0 %v931, 64
    %v934 = vpop.permute.xlu0 %933
    %v936 = vmul.f32 %v918, %v934
    %938 = vrot.lane.b32.xlu0 %v936, 32
    %v939 = vpop.permute.xlu0 %938
    %v940 = vsel %vm146, %v939, 0
    %942 = vmatpush.msra.mxu0 0.0
    %943 = vmatpush.msra.mxu0 0.0
    %944 = vmatpush.msra.mxu0 0.0
    %945 = vmatpush.msra.mxu0 0.0
    %946 = vmatpush.msra.mxu0 0.0
    %947 = vmatpush.msra.mxu0 0.0
    %948 = vmatpush.msra.mxu0 0.0
    %949 = vmatpush.msra.mxu0 0.0
    %950 = vmatpush.msra.mxu0 0.0
    %951 = vmatpush.msra.mxu0 0.0
    %952 = vmatpush.msra.mxu0 0.0
    %953 = vmatpush.msra.mxu0 0.0
    %954 = vmatpush.msra.mxu0 %v683
    %955 = vmatpush.msra.mxu0 %v682
    %956 = vmatpush.msra.mxu0 %v681
    %957 = vmatpush.msra.mxu0 %v680
    %958 = vmatmul.f32.gmra.mxu0 %v940
    %v959 = vpop.f32.mrf.mxu0
    %v960 = vadd.f32 0.0, %v959
    %961 = vdwg.mxu0
    %v962 = vadd.f32 %v739, %v960
    %v963 = vxor.u32 %v962, 2147483648
    %v964 = vmul.f32 %v963, 1.442695
    %v965 = vpow.pop %v964
    %v966 = vadd.f32 %v965, 1.0
    %v967 = vrcp.pop %v966
    %v968 = vmul.f32 %v966, %v967
    %v969 = vsub.f32 1.0, %v968
    %v970 = vmul.f32 %v967, %v969
    %v971 = vadd.f32 %v967, %v970
    %vm972 = vweird.f32 %v966
    %vm973 = vweird.f32 %v967
    %vm974 = vmor %vm972, %vm973
    %v975 = vsel %vm974, %v967, %v971
    %v976 = vand.u32 2147483647, %v966
    %vm977 = vcmp.eq.f32.partialorder %v976, 8.507059e+37
    %v978 = vand.u32 %v966, 2147483648
    %v979 = vor.u32 1.1754944e-38, %v978
    %v980 = vsel %vm977, %v979, %v975
    %v981 = vmul.f32 1.0, %v980
    %v982 = vtanh.pop %v962
    %v983 = vmul.f32 %v981, %v930
    %985 = vrot.lane.b32.xlu0 %v982, 64
    %v986 = vpop.permute.xlu0 %985
    %v988 = vmul.f32 %v981, %v986
    %990 = vrot.lane.b32.xlu0 %v988, 32
    %v991 = vpop.permute.xlu0 %990
    %v993 = vadd.f32 %v983, %v991
    %v994 = vtanh.pop %v993
    %996 = vrot.lane.b32.xlu0 %v994, 64
    %v997 = vpop.permute.xlu0 %996
    %v999 = vmul.f32 %v981, %v997
    %1001 = vrot.lane.b32.xlu0 %v999, 32
    %v1002 = vpop.permute.xlu0 %1001
    %v1003 = vsel %vm146, %v1002, 0
    %1005 = vmatpush.msra.mxu0 0.0
    %1006 = vmatpush.msra.mxu0 0.0
    %1007 = vmatpush.msra.mxu0 0.0
    %1008 = vmatpush.msra.mxu0 0.0
    %1009 = vmatpush.msra.mxu0 0.0
    %1010 = vmatpush.msra.mxu0 0.0
    %1011 = vmatpush.msra.mxu0 0.0
    %1012 = vmatpush.msra.mxu0 0.0
    %1013 = vmatpush.msra.mxu0 0.0
    %1014 = vmatpush.msra.mxu0 0.0
    %1015 = vmatpush.msra.mxu0 0.0
    %1016 = vmatpush.msra.mxu0 0.0
    %1017 = vmatpush.msra.mxu0 %v683
    %1018 = vmatpush.msra.mxu0 %v682
    %1019 = vmatpush.msra.mxu0 %v681
    %1020 = vmatpush.msra.mxu0 %v680
    %1021 = vmatmul.f32.gmra.mxu0 %v1003
    %v1022 = vpop.f32.mrf.mxu0
    %v1023 = vadd.f32 0.0, %v1022
    %1024 = vdwg.mxu0
    %v1025 = vadd.f32 %v742, %v1023
    %v1026 = vxor.u32 %v1025, 2147483648
    %v1027 = vmul.f32 %v1026, 1.442695
    %v1028 = vpow.pop %v1027
    %v1029 = vadd.f32 %v1028, 1.0
    %v1030 = vrcp.pop %v1029
    %v1031 = vmul.f32 %v1029, %v1030
    %v1032 = vsub.f32 1.0, %v1031
    %v1033 = vmul.f32 %v1030, %v1032
    %v1034 = vadd.f32 %v1030, %v1033
    %vm1035 = vweird.f32 %v1029
    %vm1036 = vweird.f32 %v1030
    %vm1037 = vmor %vm1035, %vm1036
    %v1038 = vsel %vm1037, %v1030, %v1034
    %v1039 = vand.u32 2147483647, %v1029
    %vm1040 = vcmp.eq.f32.partialorder %v1039, 8.507059e+37
    %v1041 = vand.u32 %v1029, 2147483648
    %v1042 = vor.u32 1.1754944e-38, %v1041
    %v1043 = vsel %vm1040, %v1042, %v1038
    %v1044 = vmul.f32 1.0, %v1043
    %v1045 = vtanh.pop %v1025
    %v1046 = vmul.f32 %v1044, %v993
    %1048 = vrot.lane.b32.xlu0 %v1045, 64
    %v1049 = vpop.permute.xlu0 %1048
    %v1051 = vmul.f32 %v1044, %v1049
    %1053 = vrot.lane.b32.xlu0 %v1051, 32
    %v1054 = vpop.permute.xlu0 %1053
    %v1056 = vadd.f32 %v1046, %v1054
    %v1057 = vtanh.pop %v1056
    %1059 = vrot.lane.b32.xlu0 %v1057, 64
    %v1060 = vpop.permute.xlu0 %1059
    %v1062 = vmul.f32 %v1044, %v1060
    %1064 = vrot.lane.b32.xlu0 %v1062, 32
    %v1065 = vpop.permute.xlu0 %1064
    %v1066 = vsel %vm146, %v1065, 0
    %1068 = vmatpush.msra.mxu0 0.0
    %1069 = vmatpush.msra.mxu0 0.0
    %1070 = vmatpush.msra.mxu0 0.0
    %1071 = vmatpush.msra.mxu0 0.0
    %1072 = vmatpush.msra.mxu0 0.0
    %1073 = vmatpush.msra.mxu0 0.0
    %1074 = vmatpush.msra.mxu0 0.0
    %1075 = vmatpush.msra.mxu0 0.0
    %1076 = vmatpush.msra.mxu0 0.0
    %1077 = vmatpush.msra.mxu0 0.0
    %1078 = vmatpush.msra.mxu0 0.0
    %1079 = vmatpush.msra.mxu0 0.0
    %1080 = vmatpush.msra.mxu0 %v683
    %1081 = vmatpush.msra.mxu0 %v682
    %1082 = vmatpush.msra.mxu0 %v681
    %1083 = vmatpush.msra.mxu0 %v680
    %1084 = vmatmul.f32.gmra.mxu0 %v1066
    %v1085 = vpop.f32.mrf.mxu0
    %v1086 = vadd.f32 0.0, %v1085
    %1087 = vdwg.mxu0
    %v1088 = vadd.f32 %v745, %v1086
    %v1089 = vxor.u32 %v1088, 2147483648
    %v1090 = vmul.f32 %v1089, 1.442695
    %v1091 = vpow.pop %v1090
    %v1092 = vadd.f32 %v1091, 1.0
    %v1093 = vrcp.pop %v1092
    %v1094 = vmul.f32 %v1092, %v1093
    %v1095 = vsub.f32 1.0, %v1094
    %v1096 = vmul.f32 %v1093, %v1095
    %v1097 = vadd.f32 %v1093, %v1096
    %vm1098 = vweird.f32 %v1092
    %vm1099 = vweird.f32 %v1093
    %vm1100 = vmor %vm1098, %vm1099
    %v1101 = vsel %vm1100, %v1093, %v1097
    %v1102 = vand.u32 2147483647, %v1092
    %vm1103 = vcmp.eq.f32.partialorder %v1102, 8.507059e+37
    %v1104 = vand.u32 %v1092, 2147483648
    %v1105 = vor.u32 1.1754944e-38, %v1104
    %v1106 = vsel %vm1103, %v1105, %v1101
    %v1107 = vmul.f32 1.0, %v1106
    %v1108 = vtanh.pop %v1088
    %v1109 = vmul.f32 %v1107, %v1056
    %1111 = vrot.lane.b32.xlu0 %v1108, 64
    %v1112 = vpop.permute.xlu0 %1111
    %v1114 = vmul.f32 %v1107, %v1112
    %1116 = vrot.lane.b32.xlu0 %v1114, 32
    %v1117 = vpop.permute.xlu0 %1116
    %v1119 = vadd.f32 %v1109, %v1117
    %v1120 = vtanh.pop %v1119
    %1122 = vrot.lane.b32.xlu0 %v1120, 64
    %v1123 = vpop.permute.xlu0 %1122
    %v1125 = vmul.f32 %v1107, %v1123
    %1127 = vrot.lane.b32.xlu0 %v1125, 32
    %v1128 = vpop.permute.xlu0 %1127
    %v1129 = vsel %vm146, %v1128, 0
    %1131 = vmatpush.msra.mxu0 0.0
    %1132 = vmatpush.msra.mxu0 0.0
    %1133 = vmatpush.msra.mxu0 0.0
    %1134 = vmatpush.msra.mxu0 0.0
    %1135 = vmatpush.msra.mxu0 0.0
    %1136 = vmatpush.msra.mxu0 0.0
    %1137 = vmatpush.msra.mxu0 0.0
    %1138 = vmatpush.msra.mxu0 0.0
    %1139 = vmatpush.msra.mxu0 0.0
    %1140 = vmatpush.msra.mxu0 0.0
    %1141 = vmatpush.msra.mxu0 0.0
    %1142 = vmatpush.msra.mxu0 0.0
    %1143 = vmatpush.msra.mxu0 %v683
    %1144 = vmatpush.msra.mxu0 %v682
    %1145 = vmatpush.msra.mxu0 %v681
    %1146 = vmatpush.msra.mxu0 %v680
    %1147 = vmatmul.f32.gmra.mxu0 %v1129
    %v1148 = vpop.f32.mrf.mxu0
    %v1149 = vadd.f32 0.0, %v1148
    %1150 = vdwg.mxu0
    %v1151 = vadd.f32 %v748, %v1149
    %v1152 = vxor.u32 %v1151, 2147483648
    %v1153 = vmul.f32 %v1152, 1.442695
    %v1154 = vpow.pop %v1153
    %v1155 = vadd.f32 %v1154, 1.0
    %v1156 = vrcp.pop %v1155
    %v1157 = vmul.f32 %v1155, %v1156
    %v1158 = vsub.f32 1.0, %v1157
    %v1159 = vmul.f32 %v1156, %v1158
    %v1160 = vadd.f32 %v1156, %v1159
    %vm1161 = vweird.f32 %v1155
    %vm1162 = vweird.f32 %v1156
    %vm1163 = vmor %vm1161, %vm1162
    %v1164 = vsel %vm1163, %v1156, %v1160
    %v1165 = vand.u32 2147483647, %v1155
    %vm1166 = vcmp.eq.f32.partialorder %v1165, 8.507059e+37
    %v1167 = vand.u32 %v1155, 2147483648
    %v1168 = vor.u32 1.1754944e-38, %v1167
    %v1169 = vsel %vm1166, %v1168, %v1164
    %v1170 = vmul.f32 1.0, %v1169
    %v1171 = vtanh.pop %v1151
    %v1172 = vmul.f32 %v1170, %v1119
    %1174 = vrot.lane.b32.xlu0 %v1171, 64
    %v1175 = vpop.permute.xlu0 %1174
    %v1177 = vmul.f32 %v1170, %v1175
    %1179 = vrot.lane.b32.xlu0 %v1177, 32
    %v1180 = vpop.permute.xlu0 %1179
    %v1182 = vadd.f32 %v1172, %v1180
    %v1183 = vtanh.pop %v1182
    %1185 = vrot.lane.b32.xlu0 %v1183, 64
    %v1186 = vpop.permute.xlu0 %1185
    %v1188 = vmul.f32 %v1170, %v1186
    %1190 = vrot.lane.b32.xlu0 %v1188, 32
    %v1191 = vpop.permute.xlu0 %1190
    %v1192 = vsel %vm146, %v1191, 0
    %1194 = vmatpush.msra.mxu0 0.0
    %1195 = vmatpush.msra.mxu0 0.0
    %1196 = vmatpush.msra.mxu0 0.0
    %1197 = vmatpush.msra.mxu0 0.0
    %1198 = vmatpush.msra.mxu0 0.0
    %1199 = vmatpush.msra.mxu0 0.0
    %1200 = vmatpush.msra.mxu0 0.0
    %1201 = vmatpush.msra.mxu0 0.0
    %1202 = vmatpush.msra.mxu0 0.0
    %1203 = vmatpush.msra.mxu0 0.0
    %1204 = vmatpush.msra.mxu0 0.0
    %1205 = vmatpush.msra.mxu0 0.0
    %1206 = vmatpush.msra.mxu0 %v683
    %1207 = vmatpush.msra.mxu0 %v682
    %1208 = vmatpush.msra.mxu0 %v681
    %1209 = vmatpush.msra.mxu0 %v680
    %1210 = vmatmul.f32.gmra.mxu0 %v1192
    %v1211 = vpop.f32.mrf.mxu0
    %v1212 = vadd.f32 0.0, %v1211
    %1213 = vdwg.mxu0
    %v1214 = vadd.f32 %v751, %v1212
    %v1215 = vxor.u32 %v1214, 2147483648
    %v1216 = vmul.f32 %v1215, 1.442695
    %v1217 = vpow.pop %v1216
    %v1218 = vadd.f32 %v1217, 1.0
    %v1219 = vrcp.pop %v1218
    %v1220 = vmul.f32 %v1218, %v1219
    %v1221 = vsub.f32 1.0, %v1220
    %v1222 = vmul.f32 %v1219, %v1221
    %v1223 = vadd.f32 %v1219, %v1222
    %vm1224 = vweird.f32 %v1218
    %vm1225 = vweird.f32 %v1219
    %vm1226 = vmor %vm1224, %vm1225
    %v1227 = vsel %vm1226, %v1219, %v1223
    %v1228 = vand.u32 2147483647, %v1218
    %vm1229 = vcmp.eq.f32.partialorder %v1228, 8.507059e+37
    %v1230 = vand.u32 %v1218, 2147483648
    %v1231 = vor.u32 1.1754944e-38, %v1230
    %v1232 = vsel %vm1229, %v1231, %v1227
    %v1233 = vmul.f32 1.0, %v1232
    %v1234 = vtanh.pop %v1214
    %v1235 = vmul.f32 %v1233, %v1182
    %1237 = vrot.lane.b32.xlu0 %v1234, 64
    %v1238 = vpop.permute.xlu0 %1237
    %v1240 = vmul.f32 %v1233, %v1238
    %1242 = vrot.lane.b32.xlu0 %v1240, 32
    %v1243 = vpop.permute.xlu0 %1242
    %v1245 = vadd.f32 %v1235, %v1243
    %v1246 = vtanh.pop %v1245
    %1248 = vrot.lane.b32.xlu0 %v1246, 64
    %v1249 = vpop.permute.xlu0 %1248
    %v1251 = vmul.f32 %v1233, %v1249
    %v1252 = vld [vmem:[#allocation3] sm:$0xff]
    %v1253 = vld [vmem:[#allocation3 + $0x8] sm:$0xff]
    %v1254 = vld [vmem:[#allocation3 + $0x10] sm:$0xff]
    %v1255 = vld [vmem:[#allocation3 + $0x18] sm:$0xff]
    %v1256 = vld [vmem:[#allocation5] sm:$0x1]
    %v1258 = vperm.slane %v1256, 0
    %1261 = vrot.lane.b32.xlu0 %v1251, 32
    %v1262 = vpop.permute.xlu0 %1261
    %v1263 = vsel %vm146, %v1262, 0
    %1265 = vmatpush.msra.mxu0 0.0
    %1266 = vmatpush.msra.mxu0 0.0
    %1267 = vmatpush.msra.mxu0 0.0
    %1268 = vmatpush.msra.mxu0 0.0
    %1269 = vmatpush.msra.mxu0 0.0
    %1270 = vmatpush.msra.mxu0 0.0
    %1271 = vmatpush.msra.mxu0 0.0
    %1272 = vmatpush.msra.mxu0 0.0
    %1273 = vmatpush.msra.mxu0 0.0
    %1274 = vmatpush.msra.mxu0 0.0
    %1275 = vmatpush.msra.mxu0 0.0
    %1276 = vmatpush.msra.mxu0 0.0
    %1277 = vmatpush.msra.mxu0 %v1255
    %1278 = vmatpush.msra.mxu0 %v1254
    %1279 = vmatpush.msra.mxu0 %v1253
    %1280 = vmatpush.msra.mxu0 %v1252
    %1281 = vmatmul.f32.gmra.mxu0 %v1263
    %v1282 = vpop.f32.mrf.mxu0
    %v1283 = vadd.f32 %v1258, %v1282
    %1284 = vdwg.mxu0
    %1285 = vst [vmem:[%s9] sm:$0xff] %v1283
    // Predicated region
    $region46: #{lstm_model_forward.1} parent=1 // pred_check
      _
    $region47: #{lstm_model_forward.1} parent=1 // pred_check_branch
      %1287 = sbr.rel (0) target = $region49
    $region48: #{lstm_model_forward.1} parent=1 // pred_region
      _
    $region49: #{lstm_model_forward.1} parent=1 // pred_fallthru
      _
    // Predicated region
    $region50: #{lstm_model_forward.1} parent=1 // pred_check
      _
    $region51: #{lstm_model_forward.1} parent=1 // pred_check_branch
      %1289 = sbr.rel (0) target = $region53
    $region52: #{lstm_model_forward.1} parent=1 // pred_region
      _
    $region53: #{lstm_model_forward.1} parent=1 // pred_fallthru
      _
    %1290 = vsyncpa [#allocation4], 1
    %1291 = vsyncpa [#allocation6], 1

</llo_original>
